<compile_context>
chip_gen: v5e
topology: v5e:2x2
jax: 0.10.0
libtpu: 0.0.40
codegen_flags: <defaults>
</compile_context>

<pallas_src>
import math

import jax
import jax.numpy as jnp
from jax import lax
from jax.experimental import pallas as pl
from jax.experimental.pallas import tpu as pltpu

GAMMA1 = 4.0
GAMMA2 = 5.0
GAMMA3 = 10.0
EPS = 1e-8


# ----------------------------------------------------------------------------
# plain-JAX epilogue: nn.CrossEntropyLoss()(scores, arange(B)), reduction='mean'
# ----------------------------------------------------------------------------
def _ce_arange(scores):
    lse = jax.nn.logsumexp(scores, axis=1)
    diag = jnp.diagonal(scores)
    return jnp.mean(lse - diag)


# ----------------------------------------------------------------------------
# Kernel 1: surrogate image encoder (1x1-conv-like projection + global pool)
#   TODO(synk): the real CNN_ENCODER is a pretrained Inception-v3; replaced by a
#   deterministic linear projection (checkpoint loading has no Pallas equivalent).
# ----------------------------------------------------------------------------
def _img_enc_kernel(x_ref, ww_ref, ws_ref, reg_ref, code_ref):
    x = x_ref[0]                                                   # (S, C)
    reg = jnp.dot(x, ww_ref[...], preferred_element_type=jnp.float32)   # (S, D)
    reg_ref[...] = reg.astype(reg_ref.dtype)[None, :, :]
    pooled = jnp.mean(x, axis=0, keepdims=True)                    # (1, C) global pool
    code = jnp.dot(pooled, ws_ref[...], preferred_element_type=jnp.float32)  # (1, D)
    code_ref[...] = code[:, None, :]                               # (1, 1, D)


def encode_image(x_flat, w_words, w_sent):
    B, S, C = x_flat.shape
    D = w_words.shape[1]
    regions, code3 = pl.pallas_call(
        _img_enc_kernel,
        grid=(B,),
        in_specs=[
            pl.BlockSpec((1, S, C), lambda b: (b, 0, 0)),
            pl.BlockSpec((C, D), lambda b: (0, 0)),
            pl.BlockSpec((C, D), lambda b: (0, 0)),
        ],
        out_specs=(
            pl.BlockSpec((1, S, D), lambda b: (b, 0, 0)),
            pl.BlockSpec((1, 1, D), lambda b: (b, 0, 0)),
        ),
        out_shape=(
            jax.ShapeDtypeStruct((B, S, D), jnp.bfloat16),   # regions (bf16 MXU operand)
            jax.ShapeDtypeStruct((B, 1, D), jnp.float32),    # cnn_code
        ),
        compiler_params=pltpu.CompilerParams(
            dimension_semantics=("parallel",)),
    )(x_flat, w_words, w_sent)
    return regions, code3.reshape(B, D)


# ----------------------------------------------------------------------------
# Kernel 2: surrogate text encoder (embedding projection + masked mean pooling)
#   Also emits the per-word L2 norms so the loss kernel never recomputes them.
#   TODO(synk): the real RNN_ENCODER is a pretrained bidirectional LSTM; replaced
#   by a deterministic linear projection with length-masked mean for sent_emb.
# ----------------------------------------------------------------------------
def _text_enc_kernel(lens_ref, tok_ref, w_ref, words_ref, sent_ref, wnorm_ref):
    tok = tok_ref[...]                                             # (B, T, E)
    we = jnp.einsum("bte,ed->btd", tok, w_ref[...],
                    preferred_element_type=jnp.float32)            # (B, T, D)
    words_ref[...] = we.astype(words_ref.dtype)
    wnorm_ref[...] = jnp.sqrt(jnp.sum(we * we, axis=-1))           # (B, T)
    B, T, _ = we.shape
    t_iota = lax.broadcasted_iota(jnp.int32, (B, T), 1)
    mask = (t_iota < lens_ref[...]).astype(jnp.float32)            # (B, T) vectorized
    denom = jnp.maximum(jnp.sum(mask, axis=1, keepdims=True), 1.0)
    sent_ref[...] = jnp.sum(we * mask[:, :, None], axis=1) / denom


def encode_text(tok_emb, w_proj, cap_lens):
    B, T, E = tok_emb.shape
    D = w_proj.shape[1]
    lens2d = cap_lens.reshape(B, 1).astype(jnp.int32)
    return pl.pallas_call(
        _text_enc_kernel,
        out_shape=(
            jax.ShapeDtypeStruct((B, T, D), jnp.bfloat16),   # words_emb
            jax.ShapeDtypeStruct((B, D), jnp.float32),       # sent_emb
            jax.ShapeDtypeStruct((B, T), jnp.float32),       # per-word L2 norms
        ),
    )(lens2d, tok_emb, w_proj)


# ----------------------------------------------------------------------------
# Kernel 3 (hot path): words_loss similarity matrix.
#   Grid = (image blocks, captions); step (j, i) computes the caption-i column
#   for one block of images with lane-dense (bimg, T, S) intermediates.
# ----------------------------------------------------------------------------
def _words_sim_kernel(cap_lens_ref, img_ref, word_ref, wnorm_ref, out_ref):
    i = pl.program_id(1)                       # caption index (inner grid axis)
    n_i = cap_lens_ref[i]                      # scalar caption length (SMEM)

    img = img_ref[...]                         # (bimg, S, D) bf16
    word = word_ref[0]                         # (T, D)       bf16
    w_norm = wnorm_ref[0]                      # (1, T)       f32 (precomputed)
    bimg, S, D = img.shape
    T = word.shape[0]

    # --- attention scores: lane axis = S, batched bf16 MXU matmul (K=D, N=S) ---
    wb = jnp.broadcast_to(word[None, :, :], (bimg, T, D))
    attn = jnp.einsum("btd,bsd->bts", wb, img,
                      preferred_element_type=jnp.float32)          # (bimg, T, S)

    # mask padded word rows, softmax over words (axis=1; cheap sublane reduce)
    t_valid3 = lax.broadcasted_iota(jnp.int32, (1, T, 1), 1) < n_i
    attn = jnp.where(t_valid3, attn, jnp.float32(-1e9))
    m0 = jnp.max(attn, axis=1, keepdims=True)
    e0 = jnp.exp(attn - m0)
    p1 = e0 * pl.reciprocal(jnp.sum(e0, axis=1, keepdims=True), approx=True)

    # softmax over image regions (axis=2 == lane axis)
    a1 = p1 * GAMMA1
    m1 = jnp.max(a1, axis=2, keepdims=True)
    e1 = jnp.exp(a1 - m1)
    p2 = e1 * pl.reciprocal(jnp.sum(e1, axis=2, keepdims=True), approx=True)

    # weighted image context per word (bimg, T, D), f32 accumulation on MXU
    wei = jnp.einsum("bts,bsd->btd", p2.astype(jnp.bfloat16), img,
                     preferred_element_type=jnp.float32)

    # cosine similarity per (image, word)
    wf = word.astype(jnp.float32)[None, :, :]                      # (1, T, D)
    num = jnp.sum(wei * wf, axis=-1)                               # (bimg, T)
    c_norm = jnp.sqrt(jnp.sum(wei * wei, axis=-1))                 # (bimg, T)
    row_sim = num * pl.reciprocal(jnp.maximum(w_norm * c_norm, EPS), approx=True)

    # masked sum_t exp(gamma2*cos) via a (1,T)x(bimg,T)^T matmul so the result
    # lands lane-oriented as (1, bimg) with no transpose.
    e = jnp.exp(row_sim * GAMMA2)                                  # (bimg, T)
    t_mask = (lax.broadcasted_iota(jnp.int32, (1, T), 1) < n_i).astype(jnp.float32)
    s = lax.dot_general(t_mask, e, (((1,), (1,)), ((), ())),
                        preferred_element_type=jnp.float32)        # (1, bimg)
    # tiny floor only guards cap_len==0 (which would crash the PyTorch reference)
    out_ref[...] = (GAMMA3 * jnp.log(jnp.maximum(s, 1e-30)))[:, None, :]


def words_sim_matrix(regions, words_emb, w_norm, cap_lens, *, img_block=None):
    B, S, D = regions.shape
    Bc, T, _ = words_emb.shape
    bimg = img_block or math.gcd(B, 8)
    n_j = B // bimg
    w_norm3 = w_norm.reshape(Bc, 1, T)

    grid_spec = pltpu.PrefetchScalarGridSpec(
        num_scalar_prefetch=1,
        grid=(n_j, Bc),                 # image blocks outer (stay resident), captions inner
        in_specs=[
            pl.BlockSpec((bimg, S, D), lambda j, i, cl: (j, 0, 0)),
            pl.BlockSpec((1, T, D), lambda j, i, cl: (i, 0, 0)),
            pl.BlockSpec((1, 1, T), lambda j, i, cl: (i, 0, 0)),
        ],
        out_specs=pl.BlockSpec((1, 1, bimg), lambda j, i, cl: (i, j, 0)),
    )
    out = pl.pallas_call(
        _words_sim_kernel,
        grid_spec=grid_spec,
        out_shape=jax.ShapeDtypeStruct((Bc, n_j, bimg), jnp.float32),
        compiler_params=pltpu.CompilerParams(
            dimension_semantics=("parallel", "parallel"),
            vmem_limit_bytes=32 * 1024 * 1024),
    )(cap_lens.astype(jnp.int32), regions, words_emb, w_norm3)
    return out.reshape(Bc, B)           # sims_t[i, b] = similarity(image b, caption i)


# ----------------------------------------------------------------------------
# Kernel 4: sent_loss cosine score matrix (tiny, full-block kernel)
# ----------------------------------------------------------------------------
def _sent_scores_kernel(cnn_ref, sent_ref, out_ref):
    c = cnn_ref[...]
    r = sent_ref[...]
    cn = jnp.sqrt(jnp.sum(c * c, axis=-1, keepdims=True))          # (B, 1)
    rn = jnp.sqrt(jnp.sum(r * r, axis=-1, keepdims=True))          # (B, 1)
    sc = jnp.dot(c, r.T, preferred_element_type=jnp.float32)       # (B, B)
    out_ref[...] = sc / jnp.maximum(cn * rn.T, EPS) * GAMMA3


def sent_scores(cnn_code, sent_emb):
    B = cnn_code.shape[0]
    return pl.pallas_call(
        _sent_scores_kernel,
        out_shape=jax.ShapeDtypeStruct((B, B), jnp.float32),
    )(cnn_code, sent_emb)


# ----------------------------------------------------------------------------
# Glue: full forward pass
# ----------------------------------------------------------------------------
def init_params(key, n_words, emb_dim, nef, img_channels):
    k0, k1, k2, k3 = jax.random.split(key, 4)
    return {
        "embedding":   0.1 * jax.random.normal(k0, (n_words, emb_dim), jnp.float32),
        "w_txt":       0.1 * jax.random.normal(k1, (emb_dim, nef), jnp.float32),
        "w_img_words": 0.1 * jax.random.normal(k2, (img_channels, nef), jnp.float32),
        "w_img_sent":  0.1 * jax.random.normal(k3, (img_channels, nef), jnp.float32),
    }


@jax.jit
def damsm_forward(image, captions, cap_lens, params):
    # image arrives NCHW (PyTorch convention); convert to region-major (B, S, C).
    B, C, H, W = image.shape
    x_flat = jnp.transpose(image, (0, 2, 3, 1)).reshape(B, H * W, C)
    regions, cnn_code = encode_image(
        x_flat, params["w_img_words"], params["w_img_sent"])
    # TODO(synk): preprocess() string tokenization (RegexpTokenizer + wordtoix) is
    # host-side text handling with no Pallas equivalent; token ids are inputs here.
    tok_emb = params["embedding"][captions]                        # (B, T, E) gather glue
    words_emb, sent_emb, w_norm = encode_text(tok_emb, params["w_txt"], cap_lens)

    sims_t = words_sim_matrix(regions, words_emb, w_norm, cap_lens)  # (Bcap, Bimg)
    w_loss0 = _ce_arange(sims_t.T)       # rows = images (PyTorch `similarities`)
    w_loss1 = _ce_arange(sims_t)

    scores0 = sent_scores(cnn_code, sent_emb)                      # (B, B)
    s_loss0 = _ce_arange(scores0)
    s_loss1 = _ce_arange(scores0.T)

    return w_loss0 + w_loss1 + s_loss0 + s_loss1


if __name__ == "__main__":
    B, C, H, W = 2, 4, 16, 16          # image batch (NCHW)
    T, n_words, E, D = 8, 50, 32, 32   # seq len, vocab, token-emb dim, nef

    key = jax.random.PRNGKey(0)
    kp, ki, kc = jax.random.split(key, 3)
    params = init_params(kp, n_words, E, D, C)

    image = jax.random.normal(ki, (B, C, H, W), jnp.float32)
    captions = jax.random.randint(kc, (B, T), 1, n_words, dtype=jnp.int32)
    cap_lens = jnp.array([8, 6], dtype=jnp.int32)

    loss = damsm_forward(image, captions, cap_lens, params)
    jax.block_until_ready(loss)
    assert jnp.isfinite(loss)
    print("KERNEL_OK")
</pallas_src>

<mosaic_0001>
module attributes {stable_mosaic.version = 11 : i64} {
  func.func @_img_enc_kernel(%arg0: i32, %arg1: memref<1x256x4xf32, #tpu.memory_space<vmem>>, %arg2: memref<4x32xf32, #tpu.memory_space<vmem>>, %arg3: memref<4x32xf32, #tpu.memory_space<vmem>>, %arg4: memref<1x256x32xbf16, #tpu.memory_space<vmem>>, %arg5: memref<1x1x32xf32, #tpu.memory_space<vmem>>) attributes {dimension_semantics = [#tpu.dimension_semantics<parallel>], iteration_bounds = array<i64: 2>, scalar_prefetch = 0 : i64, scratch_operands = 0 : i64, tpu.core_type = #tpu.core_type<tc>, window_params = [{transform_indices = @transform_0, window_bounds = array<i64: 1, 256, 4>}, {pipeline_mode = #tpu.pipeline_mode<synchronous>, transform_indices = @transform_1, window_bounds = array<i64: 4, 32>}, {pipeline_mode = #tpu.pipeline_mode<synchronous>, transform_indices = @transform_2, window_bounds = array<i64: 4, 32>}, {transform_indices = @transform_3, window_bounds = array<i64: 1, 256, 32>}, {transform_indices = @transform_4, window_bounds = array<i64: 1, 1, 32>}]} {
    %c0 = arith.constant 0 : index
    %c0_0 = arith.constant 0 : index
    %c0_1 = arith.constant 0 : index
    %0 = vector.load %arg1[%c0, %c0_0, %c0_1] : memref<1x256x4xf32, #tpu.memory_space<vmem>>, vector<1x256x4xf32>
    %1 = vector.shape_cast %0 : vector<1x256x4xf32> to vector<256x4xf32>
    %c0_2 = arith.constant 0 : index
    %c0_3 = arith.constant 0 : index
    %2 = vector.load %arg2[%c0_2, %c0_3] : memref<4x32xf32, #tpu.memory_space<vmem>>, vector<4x32xf32>
    %cst = arith.constant dense<0.000000e+00> : vector<256x32xf32>
    %3 = tpu.matmul %1, %2, %cst {dimension_numbers = #tpu.dot_dimension_numbers<[1], [0], [0], [1], [0, 0, 1, 1], [], []>} : vector<256x4xf32>, vector<4x32xf32>, vector<256x32xf32> -> vector<256x32xf32>
    %4 = arith.truncf %3 : vector<256x32xf32> to vector<256x32xbf16>
    %5 = vector.shape_cast %4 : vector<256x32xbf16> to vector<1x256x32xbf16>
    %c0_4 = arith.constant 0 : index
    %c0_5 = arith.constant 0 : index
    %c0_6 = arith.constant 0 : index
    %6 = vector.load %arg4[%c0_4, %c0_5, %c0_6] : memref<1x256x32xbf16, #tpu.memory_space<vmem>>, vector<1x256x32xbf16>
    tpu.vector_store %arg4[%c0_4, %c0_5, %c0_6], %5 {strides = array<i32>} : memref<1x256x32xbf16, #tpu.memory_space<vmem>>, vector<1x256x32xbf16>,
    %cst_7 = arith.constant dense<0.000000e+00> : vector<4xf32>
    %7 = vector.multi_reduction <add>, %1, %cst_7 [0] : vector<256x4xf32> to vector<4xf32>
    %8 = vector.shape_cast %7 : vector<4xf32> to vector<1x4xf32>
    %cst_8 = arith.constant 2.560000e+02 : f32
    %9 = vector.broadcast %cst_8 : f32 to vector<1x4xf32>
    %10 = arith.divf %8, %9 : vector<1x4xf32>
    %c0_9 = arith.constant 0 : index
    %c0_10 = arith.constant 0 : index
    %11 = vector.load %arg3[%c0_9, %c0_10] : memref<4x32xf32, #tpu.memory_space<vmem>>, vector<4x32xf32>
    %cst_11 = arith.constant dense<0.000000e+00> : vector<1x32xf32>
    %12 = tpu.matmul %10, %11, %cst_11 {dimension_numbers = #tpu.dot_dimension_numbers<[1], [0], [0], [1], [0, 0, 1, 1], [], []>} : vector<1x4xf32>, vector<4x32xf32>, vector<1x32xf32> -> vector<1x32xf32>
    %13 = vector.shape_cast %12 : vector<1x32xf32> to vector<1x1x32xf32>
    %c0_12 = arith.constant 0 : index
    %c0_13 = arith.constant 0 : index
    %c0_14 = arith.constant 0 : index
    %14 = vector.load %arg5[%c0_12, %c0_13, %c0_14] : memref<1x1x32xf32, #tpu.memory_space<vmem>>, vector<1x1x32xf32>
    tpu.vector_store %arg5[%c0_12, %c0_13, %c0_14], %13 {strides = array<i32>} : memref<1x1x32xf32, #tpu.memory_space<vmem>>, vector<1x1x32xf32>,
    return
  }
  func.func @transform_0(%arg0: i32) -> (i32, i32, i32) {
    %c0_i32 = arith.constant 0 : i32
    %c0_i32_0 = arith.constant 0 : i32
    %c0_i32_1 = arith.constant 0 : i32
    return %arg0, %c0_i32, %c0_i32_0 : i32, i32, i32
  }
  func.func @transform_1(%arg0: i32) -> (i32, i32) {
    %c0_i32 = arith.constant 0 : i32
    %c0_i32_0 = arith.constant 0 : i32
    %c0_i32_1 = arith.constant 0 : i32
    return %c0_i32, %c0_i32_0 : i32, i32
  }
  func.func @transform_2(%arg0: i32) -> (i32, i32) {
    %c0_i32 = arith.constant 0 : i32
    %c0_i32_0 = arith.constant 0 : i32
    %c0_i32_1 = arith.constant 0 : i32
    return %c0_i32, %c0_i32_0 : i32, i32
  }
  func.func @transform_3(%arg0: i32) -> (i32, i32, i32) {
    %c0_i32 = arith.constant 0 : i32
    %c0_i32_0 = arith.constant 0 : i32
    %c0_i32_1 = arith.constant 0 : i32
    return %arg0, %c0_i32, %c0_i32_0 : i32, i32, i32
  }
  func.func @transform_4(%arg0: i32) -> (i32, i32, i32) {
    %c0_i32 = arith.constant 0 : i32
    %c0_i32_0 = arith.constant 0 : i32
    %c0_i32_1 = arith.constant 0 : i32
    return %arg0, %c0_i32, %c0_i32_0 : i32, i32, i32
  }
}

module attributes {stable_mosaic.version = 11 : i64} {
  func.func @_words_sim_kernel(%arg0: i32, %arg1: i32, %arg2: memref<2xi32, #tpu.memory_space<smem>>, %arg3: memref<2x256x32xbf16, #tpu.memory_space<vmem>>, %arg4: memref<1x8x32xbf16, #tpu.memory_space<vmem>>, %arg5: memref<1x1x8xf32, #tpu.memory_space<vmem>>, %arg6: memref<1x1x2xf32, #tpu.memory_space<vmem>>) attributes {dimension_semantics = [#tpu.dimension_semantics<parallel>, #tpu.dimension_semantics<parallel>], iteration_bounds = array<i64: 1, 2>, scalar_prefetch = 1 : i64, scratch_operands = 0 : i64, tpu.core_type = #tpu.core_type<tc>, window_params = [{transform_indices = @transform_0, window_bounds = array<i64: 2, 256, 32>}, {transform_indices = @transform_1, window_bounds = array<i64: 1, 8, 32>}, {transform_indices = @transform_2, window_bounds = array<i64: 1, 1, 8>}, {transform_indices = @transform_3, window_bounds = array<i64: 1, 1, 2>}]} {
    %0 = arith.index_cast %arg1 : i32 to index
    %1 = memref.load %arg2[%0] : memref<2xi32, #tpu.memory_space<smem>>
    %c0 = arith.constant 0 : index
    %c0_0 = arith.constant 0 : index
    %c0_1 = arith.constant 0 : index
    %2 = vector.load %arg3[%c0, %c0_0, %c0_1] : memref<2x256x32xbf16, #tpu.memory_space<vmem>>, vector<2x256x32xbf16>
    %c0_2 = arith.constant 0 : index
    %c0_3 = arith.constant 0 : index
    %c0_4 = arith.constant 0 : index
    %3 = vector.load %arg4[%c0_2, %c0_3, %c0_4] : memref<1x8x32xbf16, #tpu.memory_space<vmem>>, vector<1x8x32xbf16>
    %4 = vector.shape_cast %3 : vector<1x8x32xbf16> to vector<8x32xbf16>
    %c0_5 = arith.constant 0 : index
    %c0_6 = arith.constant 0 : index
    %c0_7 = arith.constant 0 : index
    %5 = vector.load %arg5[%c0_5, %c0_6, %c0_7] : memref<1x1x8xf32, #tpu.memory_space<vmem>>, vector<1x1x8xf32>
    %6 = vector.shape_cast %5 : vector<1x1x8xf32> to vector<1x8xf32>
    %7 = vector.shape_cast %4 : vector<8x32xbf16> to vector<1x8x32xbf16>
    %8 = vector.shape_cast %7 : vector<1x8x32xbf16> to vector<1x8x32xbf16>
    %9 = vector.broadcast %8 : vector<1x8x32xbf16> to vector<2x8x32xbf16>
    "tpu.trace_start"() <{level = 10 : i32, message = "btd,bsd->bts"}> : () -> ()
    %cst = arith.constant dense<0.000000e+00> : vector<2x8x256xf32>
    %10 = tpu.matmul %9, %2, %cst {dimension_numbers = #tpu.dot_dimension_numbers<[2], [2], [1], [1], [0, 0, 0, 1, 1, 1], [0], [0]>} : vector<2x8x32xbf16>, vector<2x256x32xbf16>, vector<2x8x256xf32> -> vector<2x8x256xf32>
    "tpu.trace_stop"() : () -> ()
    %11 = tpu.iota {dimensions = array<i32: 1>} : vector<1x8x1xi32>
    %12 = vector.broadcast %1 : i32 to vector<1x8x1xi32>
    %13 = arith.cmpi slt, %11, %12 : vector<1x8x1xi32>
    %cst_8 = arith.constant -1.000000e+09 : f32
    %14 = vector.shape_cast %13 : vector<1x8x1xi1> to vector<1x8x1xi1>
    %15 = vector.broadcast %14 : vector<1x8x1xi1> to vector<2x8x256xi1>
    %16 = vector.broadcast %cst_8 : f32 to vector<2x8x256xf32>
    %17 = arith.select %15, %10, %16 : vector<2x8x256xi1>, vector<2x8x256xf32>
    %cst_9 = arith.constant dense<0xFF800000> : vector<2x256xf32>
    %18 = vector.multi_reduction <maximumf>, %17, %cst_9 [1] : vector<2x8x256xf32> to vector<2x256xf32>
    %19 = vector.shape_cast %18 : vector<2x256xf32> to vector<2x1x256xf32>
    %20 = vector.broadcast %19 : vector<2x1x256xf32> to vector<2x8x256xf32>
    %21 = arith.subf %17, %20 : vector<2x8x256xf32>
    %22 = math.exp %21 : vector<2x8x256xf32>
    %cst_10 = arith.constant dense<0.000000e+00> : vector<2x256xf32>
    %23 = vector.multi_reduction <add>, %22, %cst_10 [1] : vector<2x8x256xf32> to vector<2x256xf32>
    %24 = vector.shape_cast %23 : vector<2x256xf32> to vector<2x1x256xf32>
    %25 = tpu.reciprocal %24 {approx = true} : vector<2x1x256xf32> -> vector<2x1x256xf32>
    %26 = vector.broadcast %25 : vector<2x1x256xf32> to vector<2x8x256xf32>
    %27 = arith.mulf %22, %26 : vector<2x8x256xf32>
    %cst_11 = arith.constant 4.000000e+00 : f32
    %28 = vector.broadcast %cst_11 : f32 to vector<2x8x256xf32>
    %29 = arith.mulf %27, %28 : vector<2x8x256xf32>
    %cst_12 = arith.constant dense<0xFF800000> : vector<2x8xf32>
    %30 = vector.multi_reduction <maximumf>, %29, %cst_12 [2] : vector<2x8x256xf32> to vector<2x8xf32>
    %31 = vector.shape_cast %30 : vector<2x8xf32> to vector<2x8x1xf32>
    %32 = vector.broadcast %31 : vector<2x8x1xf32> to vector<2x8x256xf32>
    %33 = arith.subf %29, %32 : vector<2x8x256xf32>
    %34 = math.exp %33 : vector<2x8x256xf32>
    %cst_13 = arith.constant dense<0.000000e+00> : vector<2x8xf32>
    %35 = vector.multi_reduction <add>, %34, %cst_13 [2] : vector<2x8x256xf32> to vector<2x8xf32>
    %36 = vector.shape_cast %35 : vector<2x8xf32> to vector<2x8x1xf32>
    %37 = tpu.reciprocal %36 {approx = true} : vector<2x8x1xf32> -> vector<2x8x1xf32>
    %38 = vector.broadcast %37 : vector<2x8x1xf32> to vector<2x8x256xf32>
    %39 = arith.mulf %34, %38 : vector<2x8x256xf32>
    %40 = arith.truncf %39 : vector<2x8x256xf32> to vector<2x8x256xbf16>
    "tpu.trace_start"() <{level = 10 : i32, message = "bts,bsd->btd"}> : () -> ()
    %cst_14 = arith.constant dense<0.000000e+00> : vector<2x8x32xf32>
    %41 = tpu.matmul %40, %2, %cst_14 {dimension_numbers = #tpu.dot_dimension_numbers<[2], [1], [1], [2], [0, 0, 0, 1, 1, 2], [0], [0]>} : vector<2x8x256xbf16>, vector<2x256x32xbf16>, vector<2x8x32xf32> -> vector<2x8x32xf32>
    "tpu.trace_stop"() : () -> ()
    %42 = arith.extf %4 : vector<8x32xbf16> to vector<8x32xf32>
    %43 = vector.shape_cast %42 : vector<8x32xf32> to vector<1x8x32xf32>
    %44 = vector.broadcast %43 : vector<1x8x32xf32> to vector<2x8x32xf32>
    %45 = arith.mulf %41, %44 : vector<2x8x32xf32>
    %cst_15 = arith.constant dense<0.000000e+00> : vector<2x8xf32>
    %46 = vector.multi_reduction <add>, %45, %cst_15 [2] : vector<2x8x32xf32> to vector<2x8xf32>
    %47 = arith.mulf %41, %41 : vector<2x8x32xf32>
    %cst_16 = arith.constant dense<0.000000e+00> : vector<2x8xf32>
    %48 = vector.multi_reduction <add>, %47, %cst_16 [2] : vector<2x8x32xf32> to vector<2x8xf32>
    %49 = math.sqrt %48 : vector<2x8xf32>
    %50 = vector.broadcast %6 : vector<1x8xf32> to vector<2x8xf32>
    %51 = arith.mulf %50, %49 : vector<2x8xf32>
    %cst_17 = arith.constant 9.99999993E-9 : f32
    %52 = vector.broadcast %cst_17 : f32 to vector<2x8xf32>
    %53 = arith.maximumf %51, %52 : vector<2x8xf32>
    %54 = tpu.reciprocal %53 {approx = true} : vector<2x8xf32> -> vector<2x8xf32>
    %55 = arith.mulf %46, %54 : vector<2x8xf32>
    %cst_18 = arith.constant 5.000000e+00 : f32
    %56 = vector.broadcast %cst_18 : f32 to vector<2x8xf32>
    %57 = arith.mulf %55, %56 : vector<2x8xf32>
    %58 = math.exp %57 : vector<2x8xf32>
    %59 = tpu.iota {dimensions = array<i32: 1>} : vector<1x8xi32>
    %60 = vector.broadcast %1 : i32 to vector<1x8xi32>
    %61 = arith.cmpi slt, %59, %60 : vector<1x8xi32>
    %62 = arith.extui %61 : vector<1x8xi1> to vector<1x8xi32>
    %63 = arith.sitofp %62 : vector<1x8xi32> to vector<1x8xf32>
    %cst_19 = arith.constant dense<0.000000e+00> : vector<1x2xf32>
    %64 = tpu.matmul %63, %58, %cst_19 {dimension_numbers = #tpu.dot_dimension_numbers<[1], [1], [0], [0], [0, 0, 1, 0], [], []>} : vector<1x8xf32>, vector<2x8xf32>, vector<1x2xf32> -> vector<1x2xf32>
    %cst_20 = arith.constant 1.000000e-30 : f32
    %65 = vector.broadcast %cst_20 : f32 to vector<1x2xf32>
    %66 = arith.maximumf %64, %65 : vector<1x2xf32>
    %67 = math.log %66 : vector<1x2xf32>
    %cst_21 = arith.constant 1.000000e+01 : f32
    %68 = vector.broadcast %cst_21 : f32 to vector<1x2xf32>
    %69 = arith.mulf %68, %67 : vector<1x2xf32>
    %70 = vector.shape_cast %69 : vector<1x2xf32> to vector<1x1x2xf32>
    %c0_22 = arith.constant 0 : index
    %c0_23 = arith.constant 0 : index
    %c0_24 = arith.constant 0 : index
    %71 = vector.load %arg6[%c0_22, %c0_23, %c0_24] : memref<1x1x2xf32, #tpu.memory_space<vmem>>, vector<1x1x2xf32>
    tpu.vector_store %arg6[%c0_22, %c0_23, %c0_24], %70 {strides = array<i32>} : memref<1x1x2xf32, #tpu.memory_space<vmem>>, vector<1x1x2xf32>,
    return
  }
  func.func @transform_0(%arg0: i32, %arg1: i32, %arg2: memref<2xi32, #tpu.memory_space<smem>>) -> (i32, i32, i32) {
    %c0_i32 = arith.constant 0 : i32
    %c0_i32_0 = arith.constant 0 : i32
    %c0_i32_1 = arith.constant 0 : i32
    return %arg0, %c0_i32, %c0_i32_0 : i32, i32, i32
  }
  func.func @transform_1(%arg0: i32, %arg1: i32, %arg2: memref<2xi32, #tpu.memory_space<smem>>) -> (i32, i32, i32) {
    %c0_i32 = arith.constant 0 : i32
    %c0_i32_0 = arith.constant 0 : i32
    %c0_i32_1 = arith.constant 0 : i32
    return %arg1, %c0_i32, %c0_i32_0 : i32, i32, i32
  }
  func.func @transform_2(%arg0: i32, %arg1: i32, %arg2: memref<2xi32, #tpu.memory_space<smem>>) -> (i32, i32, i32) {
    %c0_i32 = arith.constant 0 : i32
    %c0_i32_0 = arith.constant 0 : i32
    %c0_i32_1 = arith.constant 0 : i32
    return %arg1, %c0_i32, %c0_i32_0 : i32, i32, i32
  }
  func.func @transform_3(%arg0: i32, %arg1: i32, %arg2: memref<2xi32, #tpu.memory_space<smem>>) -> (i32, i32, i32) {
    %c0_i32 = arith.constant 0 : i32
    %c0_i32_0 = arith.constant 0 : i32
    return %arg1, %arg0, %c0_i32 : i32, i32, i32
  }
}

module attributes {stable_mosaic.version = 11 : i64} {
  func.func @_text_enc_kernel(%arg0: memref<2x1xi32, #tpu.memory_space<vmem>>, %arg1: memref<2x8x32xf32, #tpu.memory_space<vmem>>, %arg2: memref<32x32xf32, #tpu.memory_space<vmem>>, %arg3: memref<2x8x32xbf16, #tpu.memory_space<vmem>>, %arg4: memref<2x32xf32, #tpu.memory_space<vmem>>, %arg5: memref<2x8xf32, #tpu.memory_space<vmem>>) attributes {dimension_semantics = [], scalar_prefetch = 0 : i64, scratch_operands = 0 : i64, tpu.core_type = #tpu.core_type<tc>} {
    %c0 = arith.constant 0 : index
    %c0_0 = arith.constant 0 : index
    %c0_1 = arith.constant 0 : index
    %0 = vector.load %arg1[%c0, %c0_0, %c0_1] : memref<2x8x32xf32, #tpu.memory_space<vmem>>, vector<2x8x32xf32>
    %c0_2 = arith.constant 0 : index
    %c0_3 = arith.constant 0 : index
    %1 = vector.load %arg2[%c0_2, %c0_3] : memref<32x32xf32, #tpu.memory_space<vmem>>, vector<32x32xf32>
    "tpu.trace_start"() <{level = 10 : i32, message = "bte,ed->btd"}> : () -> ()
    %cst = arith.constant dense<0.000000e+00> : vector<2x8x32xf32>
    %2 = tpu.matmul %0, %1, %cst {dimension_numbers = #tpu.dot_dimension_numbers<[2], [0], [0, 1], [1], [0, 0, 0, 1, 1, 1], [], []>} : vector<2x8x32xf32>, vector<32x32xf32>, vector<2x8x32xf32> -> vector<2x8x32xf32>
    "tpu.trace_stop"() : () -> ()
    %3 = arith.truncf %2 : vector<2x8x32xf32> to vector<2x8x32xbf16>
    %c0_4 = arith.constant 0 : index
    %c0_5 = arith.constant 0 : index
    %c0_6 = arith.constant 0 : index
    %4 = vector.load %arg3[%c0_4, %c0_5, %c0_6] : memref<2x8x32xbf16, #tpu.memory_space<vmem>>, vector<2x8x32xbf16>
    tpu.vector_store %arg3[%c0_4, %c0_5, %c0_6], %3 {strides = array<i32>} : memref<2x8x32xbf16, #tpu.memory_space<vmem>>, vector<2x8x32xbf16>,
    %5 = arith.mulf %2, %2 : vector<2x8x32xf32>
    %cst_7 = arith.constant dense<0.000000e+00> : vector<2x8xf32>
    %6 = vector.multi_reduction <add>, %5, %cst_7 [2] : vector<2x8x32xf32> to vector<2x8xf32>
    %7 = math.sqrt %6 : vector<2x8xf32>
    %c0_8 = arith.constant 0 : index
    %c0_9 = arith.constant 0 : index
    %8 = vector.load %arg5[%c0_8, %c0_9] : memref<2x8xf32, #tpu.memory_space<vmem>>, vector<2x8xf32>
    tpu.vector_store %arg5[%c0_8, %c0_9], %7 {strides = array<i32>} : memref<2x8xf32, #tpu.memory_space<vmem>>, vector<2x8xf32>,
    %9 = tpu.iota {dimensions = array<i32: 1>} : vector<2x8xi32>
    %c0_10 = arith.constant 0 : index
    %c0_11 = arith.constant 0 : index
    %10 = vector.load %arg0[%c0_10, %c0_11] : memref<2x1xi32, #tpu.memory_space<vmem>>, vector<2x1xi32>
    %11 = vector.broadcast %10 : vector<2x1xi32> to vector<2x8xi32>
    %12 = arith.cmpi slt, %9, %11 : vector<2x8xi32>
    %13 = arith.extui %12 : vector<2x8xi1> to vector<2x8xi32>
    %14 = arith.sitofp %13 : vector<2x8xi32> to vector<2x8xf32>
    %cst_12 = arith.constant dense<0.000000e+00> : vector<2xf32>
    %15 = vector.multi_reduction <add>, %14, %cst_12 [1] : vector<2x8xf32> to vector<2xf32>
    %16 = vector.shape_cast %15 : vector<2xf32> to vector<2x1xf32>
    %cst_13 = arith.constant 1.000000e+00 : f32
    %17 = vector.broadcast %cst_13 : f32 to vector<2x1xf32>
    %18 = arith.maximumf %16, %17 : vector<2x1xf32>
    %19 = vector.shape_cast %14 : vector<2x8xf32> to vector<2x8x1xf32>
    %20 = vector.broadcast %19 : vector<2x8x1xf32> to vector<2x8x32xf32>
    %21 = arith.mulf %2, %20 : vector<2x8x32xf32>
    %cst_14 = arith.constant dense<0.000000e+00> : vector<2x32xf32>
    %22 = vector.multi_reduction <add>, %21, %cst_14 [1] : vector<2x8x32xf32> to vector<2x32xf32>
    %23 = vector.broadcast %18 : vector<2x1xf32> to vector<2x32xf32>
    %24 = arith.divf %22, %23 : vector<2x32xf32>
    %c0_15 = arith.constant 0 : index
    %c0_16 = arith.constant 0 : index
    %25 = vector.load %arg4[%c0_15, %c0_16] : memref<2x32xf32, #tpu.memory_space<vmem>>, vector<2x32xf32>
    tpu.vector_store %arg4[%c0_15, %c0_16], %24 {strides = array<i32>} : memref<2x32xf32, #tpu.memory_space<vmem>>, vector<2x32xf32>,
    return
  }
}

module attributes {stable_mosaic.version = 11 : i64} {
  func.func @_sent_scores_kernel(%arg0: memref<2x32xf32, #tpu.memory_space<vmem>>, %arg1: memref<2x32xf32, #tpu.memory_space<vmem>>, %arg2: memref<2x2xf32, #tpu.memory_space<vmem>>) attributes {dimension_semantics = [], scalar_prefetch = 0 : i64, scratch_operands = 0 : i64, tpu.core_type = #tpu.core_type<tc>} {
    %c0 = arith.constant 0 : index
    %c0_0 = arith.constant 0 : index
    %0 = vector.load %arg0[%c0, %c0_0] : memref<2x32xf32, #tpu.memory_space<vmem>>, vector<2x32xf32>
    %c0_1 = arith.constant 0 : index
    %c0_2 = arith.constant 0 : index
    %1 = vector.load %arg1[%c0_1, %c0_2] : memref<2x32xf32, #tpu.memory_space<vmem>>, vector<2x32xf32>
    %2 = arith.mulf %0, %0 : vector<2x32xf32>
    %cst = arith.constant dense<0.000000e+00> : vector<2xf32>
    %3 = vector.multi_reduction <add>, %2, %cst [1] : vector<2x32xf32> to vector<2xf32>
    %4 = vector.shape_cast %3 : vector<2xf32> to vector<2x1xf32>
    %5 = math.sqrt %4 : vector<2x1xf32>
    %6 = arith.mulf %1, %1 : vector<2x32xf32>
    %cst_3 = arith.constant dense<0.000000e+00> : vector<2xf32>
    %7 = vector.multi_reduction <add>, %6, %cst_3 [1] : vector<2x32xf32> to vector<2xf32>
    %8 = vector.shape_cast %7 : vector<2xf32> to vector<2x1xf32>
    %9 = math.sqrt %8 : vector<2x1xf32>
    %10 = tpu.transpose %1, [1, 0] : vector<2x32xf32> -> vector<32x2xf32>
    %cst_4 = arith.constant dense<0.000000e+00> : vector<2x2xf32>
    %11 = tpu.matmul %0, %10, %cst_4 {dimension_numbers = #tpu.dot_dimension_numbers<[1], [0], [0], [1], [0, 0, 1, 1], [], []>} : vector<2x32xf32>, vector<32x2xf32>, vector<2x2xf32> -> vector<2x2xf32>
    %12 = tpu.transpose %9, [1, 0] : vector<2x1xf32> -> vector<1x2xf32>
    %13 = vector.broadcast %5 : vector<2x1xf32> to vector<2x2xf32>
    %14 = vector.broadcast %12 : vector<1x2xf32> to vector<2x2xf32>
    %15 = arith.mulf %13, %14 : vector<2x2xf32>
    %cst_5 = arith.constant 9.99999993E-9 : f32
    %16 = vector.broadcast %cst_5 : f32 to vector<2x2xf32>
    %17 = arith.maximumf %15, %16 : vector<2x2xf32>
    %18 = arith.divf %11, %17 : vector<2x2xf32>
    %cst_6 = arith.constant 1.000000e+01 : f32
    %19 = vector.broadcast %cst_6 : f32 to vector<2x2xf32>
    %20 = arith.mulf %18, %19 : vector<2x2xf32>
    %c0_7 = arith.constant 0 : index
    %c0_8 = arith.constant 0 : index
    %21 = vector.load %arg2[%c0_7, %c0_8] : memref<2x2xf32, #tpu.memory_space<vmem>>, vector<2x2xf32>
    tpu.vector_store %arg2[%c0_7, %c0_8], %20 {strides = array<i32>} : memref<2x2xf32, #tpu.memory_space<vmem>>, vector<2x2xf32>,
    return
  }
}

</mosaic_0001>

<llo_original>
// kernel: damsm_forward.4
$region0: #{damsm_forward.4}
  #allocation0 [shape = 'u32[]', space=smem, size = 0x4, offset = 0x4, fixed_abs, tag = 'smem constant byte address 0x4 - core index']
  #allocation1 [shape = 'u32[72,128]{1,0:T(1,128)}', space=vmem, size = 0x9000, scoped, tag = 'internal scratch']
  %s0 = inlined_call_operand.vmem [shape: f32[2,256,4], index: 0, kind: input, shape index: {}]
  %s1 = inlined_call_operand.vmem [shape: f32[4,32], index: 1, kind: input, shape index: {}]
  %s2 = inlined_call_operand.vmem [shape: f32[4,32], index: 2, kind: input, shape index: {}]
  %s3 = inlined_call_operand.vmem [shape: bf16[2,256,32], index: 3, kind: output, shape index: {0}]
  %s4 = inlined_call_operand.vmem [shape: f32[2,1,32], index: 4, kind: output, shape index: {1}]
  %5 = xla_tuple %s3, %s4
  %s6 = sld [smem:[#allocation0]]
  $region53: #{damsm_forward.4} parent=0
    _
  %s8 = ssub.s32 1, %s6
  %s9 = scalar_select 0, %s8, %s6
  loop: start=0, step=1, limit=4
  $region2: #{damsm_forward.4} parent=0 // loop_pre_header
    _
  $region3: #{damsm_forward.4} parent=0 // loop_header
    %s11 = sphi 0, %s15
    %p12 = scmp.ge.s32.totalorder %s11, 4
    %s21 = sphi 0, %s23
    %s24 = sphi 0, %s21
    %s25 = sphi 0, %s24
    %s41 = sphi 0, %s25
    %s45 = sphi 0, %s45
    %s47 = sphi 0, %s45
    %s48 = sphi 0, %s47
    %s62 = sphi 0, %s48
    %s66 = sphi 0, %s66
    %s68 = sphi 0, %s66
    %s69 = sphi 0, %s68
    %s83 = sphi 0, %s69
    %s89 = sphi 0, %s91
    %s92 = sphi 0, %s89
    %s93 = sphi 0, %s92
    %s109 = sphi 0, %s93
    %s115 = sphi 0, %s117
    %s118 = sphi 0, %s115
    %s119 = sphi 0, %s118
    %s135 = sphi 0, %s119
  $region4: #{damsm_forward.4} parent=0 // loop_header_branch
    %14 = sbr.rel (%p12) target = $region8
  $region5: #{damsm_forward.4} parent=0 // loop_body
    %s16 = ssub.s32 %s11, 1
    %s17 = ssub.s32 %s11, 2
    %s18 = sadd.s32 %s11, 1
    %s19 = ssub.s32 %s11, %s18
    %p20 = scmp.eq.s32.totalorder %s19, 0
    %s22 = sadd.s32 %s21, 1
    %s23 = scalar_select %p20, %s21, %s22
    %p26 = pneg %p20
    %p27 = scmp.eq.s32.totalorder %s11, 1
    %p28 = por %p26, %p27
    %p29 = scmp.ne.s32.totalorder %s21, %s24
    %p30 = scmp.eq.s32.totalorder %s11, 0
    %p31 = por %p29, %p30
    %p32 = scmp.ne.s32.totalorder %s21, %s24
    %p33 = scmp.eq.s32.totalorder %s16, 1
    %p34 = por %p32, %p33
    %p35 = scmp.ne.s32.totalorder %s24, %s25
    %p36 = scmp.eq.s32.totalorder %s16, 0
    %p37 = por %p35, %p36
    %p38 = scmp.ne.s32.totalorder %s24, %s25
    %p39 = scmp.eq.s32.totalorder %s17, 1
    %p40 = por %p38, %p39
    %p42 = scmp.ne.s32.totalorder %s25, %s41
    %p43 = scmp.eq.s32.totalorder %s17, 0
    %p44 = por %p42, %p43
    %s46 = sadd.s32 %s45, 1
    %p49 = scmp.eq.s32.totalorder %s11, 1
    %p50 = scmp.ne.s32.totalorder %s45, %s47
    %p51 = scmp.eq.s32.totalorder %s11, 0
    %p52 = por %p50, %p51
    %p53 = scmp.ne.s32.totalorder %s45, %s47
    %p54 = scmp.eq.s32.totalorder %s16, 1
    %p55 = por %p53, %p54
    %p56 = scmp.ne.s32.totalorder %s47, %s48
    %p57 = scmp.eq.s32.totalorder %s16, 0
    %p58 = por %p56, %p57
    %p59 = scmp.ne.s32.totalorder %s47, %s48
    %p60 = scmp.eq.s32.totalorder %s17, 1
    %p61 = por %p59, %p60
    %p63 = scmp.ne.s32.totalorder %s48, %s62
    %p64 = scmp.eq.s32.totalorder %s17, 0
    %p65 = por %p63, %p64
    %s67 = sadd.s32 %s66, 1
    %p70 = scmp.eq.s32.totalorder %s11, 1
    %p71 = scmp.ne.s32.totalorder %s66, %s68
    %p72 = scmp.eq.s32.totalorder %s11, 0
    %p73 = por %p71, %p72
    %p74 = scmp.ne.s32.totalorder %s66, %s68
    %p75 = scmp.eq.s32.totalorder %s16, 1
    %p76 = por %p74, %p75
    %p77 = scmp.ne.s32.totalorder %s68, %s69
    %p78 = scmp.eq.s32.totalorder %s16, 0
    %p79 = por %p77, %p78
    %p80 = scmp.ne.s32.totalorder %s68, %s69
    %p81 = scmp.eq.s32.totalorder %s17, 1
    %p82 = por %p80, %p81
    %p84 = scmp.ne.s32.totalorder %s69, %s83
    %p85 = scmp.eq.s32.totalorder %s17, 0
    %p86 = por %p84, %p85
    %s87 = ssub.s32 %s11, %s18
    %p88 = scmp.eq.s32.totalorder %s87, 0
    %s90 = sadd.s32 %s89, 1
    %s91 = scalar_select %p88, %s89, %s90
    %p94 = pneg %p88
    %p95 = scmp.eq.s32.totalorder %s11, 1
    %p96 = por %p94, %p95
    %p97 = scmp.ne.s32.totalorder %s89, %s92
    %p98 = scmp.eq.s32.totalorder %s11, 0
    %p99 = por %p97, %p98
    %p100 = scmp.ne.s32.totalorder %s89, %s92
    %p101 = scmp.eq.s32.totalorder %s16, 1
    %p102 = por %p100, %p101
    %p103 = scmp.ne.s32.totalorder %s92, %s93
    %p104 = scmp.eq.s32.totalorder %s16, 0
    %p105 = por %p103, %p104
    %p106 = scmp.ne.s32.totalorder %s92, %s93
    %p107 = scmp.eq.s32.totalorder %s17, 1
    %p108 = por %p106, %p107
    %p110 = scmp.ne.s32.totalorder %s93, %s109
    %p111 = scmp.eq.s32.totalorder %s17, 0
    %p112 = por %p110, %p111
    %s113 = ssub.s32 %s11, %s18
    %p114 = scmp.eq.s32.totalorder %s113, 0
    %s116 = sadd.s32 %s115, 1
    %s117 = scalar_select %p114, %s115, %s116
    %p120 = pneg %p114
    %p121 = scmp.eq.s32.totalorder %s11, 1
    %p122 = por %p120, %p121
    %p123 = scmp.ne.s32.totalorder %s115, %s118
    %p124 = scmp.eq.s32.totalorder %s11, 0
    %p125 = por %p123, %p124
    %p126 = scmp.ne.s32.totalorder %s115, %s118
    %p127 = scmp.eq.s32.totalorder %s16, 1
    %p128 = por %p126, %p127
    %p129 = scmp.ne.s32.totalorder %s118, %s119
    %p130 = scmp.eq.s32.totalorder %s16, 0
    %p131 = por %p129, %p130
    %p132 = scmp.ne.s32.totalorder %s118, %s119
    %p133 = scmp.eq.s32.totalorder %s17, 1
    %p134 = por %p132, %p133
    %p136 = scmp.ne.s32.totalorder %s119, %s135
    %p137 = scmp.eq.s32.totalorder %s17, 0
    %p138 = por %p136, %p137
    %p139 = scmp.le.s32.totalorder 1, %s11
    %p140 = scmp.lt.s32.totalorder %s11, 3
    %p141 = pnand %p139, %p140
    %p142 = pneg %p141
    // Predicated region
    $region9: #{damsm_forward.4} parent=5 // pred_check
      _
    $region10: #{damsm_forward.4} parent=5 // pred_check_branch
      %144 = sbr.rel (%p141) target = $region12
    $region11: #{damsm_forward.4} parent=5 // pred_region
      %s145 = ssub.s32 %s11, 1
      // Predicated region
      $region13: #{damsm_forward.4} parent=11 // pred_check
        %p146 = pneg %p58
      $region14: #{damsm_forward.4} parent=11 // pred_check_branch
        %148 = sbr.rel (%p146) target = $region16
      $region15: #{damsm_forward.4} parent=11 // pred_region
        _
      $region16: #{damsm_forward.4} parent=11 // pred_fallthru
        _
      // Predicated region
      $region17: #{damsm_forward.4} parent=11 // pred_check
        %p149 = pneg %p79
      $region18: #{damsm_forward.4} parent=11 // pred_check_branch
        %151 = sbr.rel (%p149) target = $region20
      $region19: #{damsm_forward.4} parent=11 // pred_region
        _
      $region20: #{damsm_forward.4} parent=11 // pred_fallthru
        _
    $region12: #{damsm_forward.4} parent=5 // pred_fallthru
      _
    %p152 = scmp.lt.s32.totalorder %s11, 2
    // Predicated region
    $region21: #{damsm_forward.4} parent=5 // pred_check
      %p153 = pneg %p152
    $region22: #{damsm_forward.4} parent=5 // pred_check_branch
      %155 = sbr.rel (%p153) target = $region24
    $region23: #{damsm_forward.4} parent=5 // pred_region
      // Predicated region
      $region25: #{damsm_forward.4} parent=23 // pred_check
        %p156 = pneg %p31
      $region26: #{damsm_forward.4} parent=23 // pred_check_branch
        %158 = sbr.rel (%p156) target = $region28
      $region27: #{damsm_forward.4} parent=23 // pred_region
        %p159 = scmp.lt.s32.totalorder %s11, 1
        %s160 = scalar_select %p159, %s11, 1
        %s161 = smul.addr %s160, 32
        %s162 = smul.addr %s161, 8
        %s163 = scalar_lea.vmem %s0, %s162
      $region28: #{damsm_forward.4} parent=23 // pred_fallthru
        _
    $region24: #{damsm_forward.4} parent=5 // pred_fallthru
      _
    %p164 = scmp.le.s32.totalorder 1, %s11
    %p165 = scmp.lt.s32.totalorder %s11, 3
    %p166 = pnand %p164, %p165
    %p167 = pneg %p166
    // Predicated region
    $region29: #{damsm_forward.4} parent=5 // pred_check
      _
    $region30: #{damsm_forward.4} parent=5 // pred_check_branch
      %169 = sbr.rel (%p166) target = $region32
    $region31: #{damsm_forward.4} parent=5 // pred_region
      %s170 = ssub.s32 %s11, 1
      %p171 = scmp.lt.s32.totalorder %s16, 1
      %s172 = scalar_select %p171, %s16, 1
      %s173 = smul.addr %s172, 32
      %s174 = smul.addr %s173, 8
      %s175 = scalar_lea.vmem %s0, %s174
      %p176 = pneg %p37
      %p177 = pneg %p34
      %p178 = pneg %p58
      %p179 = pneg %p55
      %p180 = pneg %p79
      %p181 = pneg %p76
      %p182 = pneg %p105
      %p183 = pneg %p102
      %p184 = scmp.lt.s32.totalorder %s16, 1
      %s185 = scalar_select %p184, %s16, 1
      %s186 = smul.addr %s185, 32
      %s187 = smul.addr %s186, 4
      %s188 = scalar_lea.vmem %s3, %s187
      %p189 = pneg %p131
      %p190 = pneg %p128
      %p191 = scmp.lt.s32.totalorder %s16, 1
      %s192 = scalar_select %p191, %s16, 1
      %s193 = scalar_lea.vmem %s4, %s192
      %p194 = scmp.lt.s32.totalorder %s16, 1
      %s195 = scalar_select %p194, %s16, 1
      %s196 = smul.addr %s195, 32
      %s197 = smul.addr %s196, 8
      %s198 = scalar_lea.vmem %s0, %s197
      %p199 = scmp.lt.s32.totalorder %s16, 1
      %s200 = scalar_select %p199, %s16, 1
      %s201 = smul.addr %s200, 32
      %s202 = smul.addr %s201, 4
      %s203 = scalar_lea.vmem %s3, %s202
      %p204 = scmp.lt.s32.totalorder %s16, 1
      %s205 = scalar_select %p204, %s16, 1
      %s206 = scalar_lea.vmem %s4, %s205
      %v207 = vld [vmem:[%s198] sm:$0xff]
      %v208 = vld [vmem:[%s198 + $0x8] sm:$0xff]
      %v209 = vld [vmem:[%s198 + $0x10] sm:$0xff]
      %v210 = vld [vmem:[%s198 + $0x18] sm:$0xff]
      %v211 = vld [vmem:[%s198 + $0x20] sm:$0xff]
      %v212 = vld [vmem:[%s198 + $0x28] sm:$0xff]
      %v213 = vld [vmem:[%s198 + $0x30] sm:$0xff]
      %v214 = vld [vmem:[%s198 + $0x38] sm:$0xff]
      %v215 = vld [vmem:[%s198 + $0x40] sm:$0xff]
      %v216 = vld [vmem:[%s198 + $0x48] sm:$0xff]
      %v217 = vld [vmem:[%s198 + $0x50] sm:$0xff]
      %v218 = vld [vmem:[%s198 + $0x58] sm:$0xff]
      %v219 = vld [vmem:[%s198 + $0x60] sm:$0xff]
      %v220 = vld [vmem:[%s198 + $0x68] sm:$0xff]
      %v221 = vld [vmem:[%s198 + $0x70] sm:$0xff]
      %v222 = vld [vmem:[%s198 + $0x78] sm:$0xff]
      %v223 = vld [vmem:[%s198 + $0x80] sm:$0xff]
      %v224 = vld [vmem:[%s198 + $0x88] sm:$0xff]
      %v225 = vld [vmem:[%s198 + $0x90] sm:$0xff]
      %v226 = vld [vmem:[%s198 + $0x98] sm:$0xff]
      %v227 = vld [vmem:[%s198 + $0xa0] sm:$0xff]
      %v228 = vld [vmem:[%s198 + $0xa8] sm:$0xff]
      %v229 = vld [vmem:[%s198 + $0xb0] sm:$0xff]
      %v230 = vld [vmem:[%s198 + $0xb8] sm:$0xff]
      %v231 = vld [vmem:[%s198 + $0xc0] sm:$0xff]
      %v232 = vld [vmem:[%s198 + $0xc8] sm:$0xff]
      %v233 = vld [vmem:[%s198 + $0xd0] sm:$0xff]
      %v234 = vld [vmem:[%s198 + $0xd8] sm:$0xff]
      %v235 = vld [vmem:[%s198 + $0xe0] sm:$0xff]
      %v236 = vld [vmem:[%s198 + $0xe8] sm:$0xff]
      %v237 = vld [vmem:[%s198 + $0xf0] sm:$0xff]
      %v238 = vld [vmem:[%s198 + $0xf8] sm:$0xff]
      %v239 = vld [vmem:[%s1] sm:$0xf]
      %vm240 = vcmask 31744
      %v242 = vsel %vm240, %v207, 0
      %v245 = vsel %vm240, %v208, 0
      %v248 = vsel %vm240, %v209, 0
      %v251 = vsel %vm240, %v210, 0
      %v254 = vsel %vm240, %v211, 0
      %v257 = vsel %vm240, %v212, 0
      %v260 = vsel %vm240, %v213, 0
      %v263 = vsel %vm240, %v214, 0
      %v266 = vsel %vm240, %v215, 0
      %v269 = vsel %vm240, %v216, 0
      %v272 = vsel %vm240, %v217, 0
      %v275 = vsel %vm240, %v218, 0
      %v278 = vsel %vm240, %v219, 0
      %v281 = vsel %vm240, %v220, 0
      %v284 = vsel %vm240, %v221, 0
      %v287 = vsel %vm240, %v222, 0
      %v290 = vsel %vm240, %v223, 0
      %v293 = vsel %vm240, %v224, 0
      %v296 = vsel %vm240, %v225, 0
      %v299 = vsel %vm240, %v226, 0
      %v302 = vsel %vm240, %v227, 0
      %v305 = vsel %vm240, %v228, 0
      %v308 = vsel %vm240, %v229, 0
      %v311 = vsel %vm240, %v230, 0
      %v314 = vsel %vm240, %v231, 0
      %v317 = vsel %vm240, %v232, 0
      %v320 = vsel %vm240, %v233, 0
      %v323 = vsel %vm240, %v234, 0
      %v326 = vsel %vm240, %v235, 0
      %v329 = vsel %vm240, %v236, 0
      %v332 = vsel %vm240, %v237, 0
      %v335 = vsel %vm240, %v238, 0
      %vm337 = vcmask 1043456
      %v339 = vsel %vm337, %v239, 0
      %341 = vmatpush.msra.mxu0 0.0
      %342 = vmatpush.msra.mxu0 0.0
      %343 = vmatpush.msra.mxu0 0.0
      %344 = vmatpush.msra.mxu0 0.0
      %345 = vmatpush.msra.mxu0 0.0
      %346 = vmatpush.msra.mxu0 0.0
      %347 = vmatpush.msra.mxu0 0.0
      %348 = vmatpush.msra.mxu0 0.0
      %349 = vmatpush.msra.mxu0 0.0
      %350 = vmatpush.msra.mxu0 0.0
      %351 = vmatpush.msra.mxu0 0.0
      %352 = vmatpush.msra.mxu0 0.0
      %353 = vmatpush.msra.mxu0 0.0
      %354 = vmatpush.msra.mxu0 0.0
      %355 = vmatpush.msra.mxu0 0.0
      %356 = vmatpush.msra.mxu0 %v339
      %357 = vmatmul.f32.gmra.mxu0 %v242
      %v358 = vpop.f32.mrf.mxu0
      %v359 = vadd.f32 0.0, %v358
      %360 = vmatmul.f32.gmra.mxu0 %v245
      %v361 = vpop.f32.mrf.mxu0
      %v362 = vadd.f32 0.0, %v361
      %363 = vmatmul.f32.gmra.mxu0 %v248
      %v364 = vpop.f32.mrf.mxu0
      %v365 = vadd.f32 0.0, %v364
      %366 = vmatmul.f32.gmra.mxu0 %v251
      %v367 = vpop.f32.mrf.mxu0
      %v368 = vadd.f32 0.0, %v367
      %369 = vmatmul.f32.gmra.mxu0 %v254
      %v370 = vpop.f32.mrf.mxu0
      %v371 = vadd.f32 0.0, %v370
      %372 = vmatmul.f32.gmra.mxu0 %v257
      %v373 = vpop.f32.mrf.mxu0
      %v374 = vadd.f32 0.0, %v373
      %375 = vmatmul.f32.gmra.mxu0 %v260
      %v376 = vpop.f32.mrf.mxu0
      %v377 = vadd.f32 0.0, %v376
      %378 = vmatmul.f32.gmra.mxu0 %v263
      %v379 = vpop.f32.mrf.mxu0
      %v380 = vadd.f32 0.0, %v379
      %381 = vmatmul.f32.gmra.mxu0 %v266
      %v382 = vpop.f32.mrf.mxu0
      %v383 = vadd.f32 0.0, %v382
      %384 = vmatmul.f32.gmra.mxu0 %v269
      %v385 = vpop.f32.mrf.mxu0
      %v386 = vadd.f32 0.0, %v385
      %387 = vmatmul.f32.gmra.mxu0 %v272
      %v388 = vpop.f32.mrf.mxu0
      %v389 = vadd.f32 0.0, %v388
      %390 = vmatmul.f32.gmra.mxu0 %v275
      %v391 = vpop.f32.mrf.mxu0
      %v392 = vadd.f32 0.0, %v391
      %393 = vmatmul.f32.gmra.mxu0 %v278
      %v394 = vpop.f32.mrf.mxu0
      %v395 = vadd.f32 0.0, %v394
      %396 = vmatmul.f32.gmra.mxu0 %v281
      %v397 = vpop.f32.mrf.mxu0
      %v398 = vadd.f32 0.0, %v397
      %399 = vmatmul.f32.gmra.mxu0 %v284
      %v400 = vpop.f32.mrf.mxu0
      %v401 = vadd.f32 0.0, %v400
      %402 = vmatmul.f32.gmra.mxu0 %v287
      %v403 = vpop.f32.mrf.mxu0
      %v404 = vadd.f32 0.0, %v403
      %405 = vmatmul.f32.gmra.mxu0 %v290
      %v406 = vpop.f32.mrf.mxu0
      %v407 = vadd.f32 0.0, %v406
      %408 = vmatmul.f32.gmra.mxu0 %v293
      %v409 = vpop.f32.mrf.mxu0
      %v410 = vadd.f32 0.0, %v409
      %411 = vmatmul.f32.gmra.mxu0 %v296
      %v412 = vpop.f32.mrf.mxu0
      %v413 = vadd.f32 0.0, %v412
      %414 = vmatmul.f32.gmra.mxu0 %v299
      %v415 = vpop.f32.mrf.mxu0
      %v416 = vadd.f32 0.0, %v415
      %417 = vmatmul.f32.gmra.mxu0 %v302
      %v418 = vpop.f32.mrf.mxu0
      %v419 = vadd.f32 0.0, %v418
      %420 = vmatmul.f32.gmra.mxu0 %v305
      %v421 = vpop.f32.mrf.mxu0
      %v422 = vadd.f32 0.0, %v421
      %423 = vmatmul.f32.gmra.mxu0 %v308
      %v424 = vpop.f32.mrf.mxu0
      %v425 = vadd.f32 0.0, %v424
      %426 = vmatmul.f32.gmra.mxu0 %v311
      %v427 = vpop.f32.mrf.mxu0
      %v428 = vadd.f32 0.0, %v427
      %429 = vmatmul.f32.gmra.mxu0 %v314
      %v430 = vpop.f32.mrf.mxu0
      %v431 = vadd.f32 0.0, %v430
      %432 = vmatmul.f32.gmra.mxu0 %v317
      %v433 = vpop.f32.mrf.mxu0
      %v434 = vadd.f32 0.0, %v433
      %435 = vmatmul.f32.gmra.mxu0 %v320
      %v436 = vpop.f32.mrf.mxu0
      %v437 = vadd.f32 0.0, %v436
      %438 = vmatmul.f32.gmra.mxu0 %v323
      %v439 = vpop.f32.mrf.mxu0
      %v440 = vadd.f32 0.0, %v439
      %441 = vmatmul.f32.gmra.mxu0 %v326
      %v442 = vpop.f32.mrf.mxu0
      %v443 = vadd.f32 0.0, %v442
      %444 = vmatmul.f32.gmra.mxu0 %v329
      %v445 = vpop.f32.mrf.mxu0
      %v446 = vadd.f32 0.0, %v445
      %447 = vmatmul.f32.gmra.mxu0 %v332
      %v448 = vpop.f32.mrf.mxu0
      %v449 = vadd.f32 0.0, %v448
      %450 = vmatmul.f32.gmra.mxu0 %v335
      %v451 = vpop.f32.mrf.mxu0
      %v452 = vadd.f32 0.0, %v451
      %453 = vdwg.mxu0
      %v454 = vpack.c.bf16 %v359, %v359
      %v455 = vpack.c.bf16 %v362, %v362
      %v456 = vpack.c.bf16 %v365, %v365
      %v457 = vpack.c.bf16 %v368, %v368
      %v458 = vpack.c.bf16 %v371, %v371
      %v459 = vpack.c.bf16 %v374, %v374
      %v460 = vpack.c.bf16 %v377, %v377
      %v461 = vpack.c.bf16 %v380, %v380
      %v462 = vpack.c.bf16 %v383, %v383
      %v463 = vpack.c.bf16 %v386, %v386
      %v464 = vpack.c.bf16 %v389, %v389
      %v465 = vpack.c.bf16 %v392, %v392
      %v466 = vpack.c.bf16 %v395, %v395
      %v467 = vpack.c.bf16 %v398, %v398
      %v468 = vpack.c.bf16 %v401, %v401
      %v469 = vpack.c.bf16 %v404, %v404
      %v470 = vpack.c.bf16 %v407, %v407
      %v471 = vpack.c.bf16 %v410, %v410
      %v472 = vpack.c.bf16 %v413, %v413
      %v473 = vpack.c.bf16 %v416, %v416
      %v474 = vpack.c.bf16 %v419, %v419
      %v475 = vpack.c.bf16 %v422, %v422
      %v476 = vpack.c.bf16 %v425, %v425
      %v477 = vpack.c.bf16 %v428, %v428
      %v478 = vpack.c.bf16 %v431, %v431
      %v479 = vpack.c.bf16 %v434, %v434
      %v480 = vpack.c.bf16 %v437, %v437
      %v481 = vpack.c.bf16 %v440, %v440
      %v482 = vpack.c.bf16 %v443, %v443
      %v483 = vpack.c.bf16 %v446, %v446
      %v484 = vpack.c.bf16 %v449, %v449
      %v485 = vpack.c.bf16 %v452, %v452
      %vm486 = vcmask 257024
      %487 = vst.msk [vmem:[%s203] sm:$0xf] %vm486, %v454
      %488 = vst.msk [vmem:[%s203 + $0x4] sm:$0xf] %vm486, %v455
      %489 = vst.msk [vmem:[%s203 + $0x8] sm:$0xf] %vm486, %v456
      %490 = vst.msk [vmem:[%s203 + $0xc] sm:$0xf] %vm486, %v457
      %491 = vst.msk [vmem:[%s203 + $0x10] sm:$0xf] %vm486, %v458
      %492 = vst.msk [vmem:[%s203 + $0x14] sm:$0xf] %vm486, %v459
      %493 = vst.msk [vmem:[%s203 + $0x18] sm:$0xf] %vm486, %v460
      %494 = vst.msk [vmem:[%s203 + $0x1c] sm:$0xf] %vm486, %v461
      %495 = vst.msk [vmem:[%s203 + $0x20] sm:$0xf] %vm486, %v462
      %496 = vst.msk [vmem:[%s203 + $0x24] sm:$0xf] %vm486, %v463
      %497 = vst.msk [vmem:[%s203 + $0x28] sm:$0xf] %vm486, %v464
      %498 = vst.msk [vmem:[%s203 + $0x2c] sm:$0xf] %vm486, %v465
      %499 = vst.msk [vmem:[%s203 + $0x30] sm:$0xf] %vm486, %v466
      %500 = vst.msk [vmem:[%s203 + $0x34] sm:$0xf] %vm486, %v467
      %501 = vst.msk [vmem:[%s203 + $0x38] sm:$0xf] %vm486, %v468
      %502 = vst.msk [vmem:[%s203 + $0x3c] sm:$0xf] %vm486, %v469
      %503 = vst.msk [vmem:[%s203 + $0x40] sm:$0xf] %vm486, %v470
      %504 = vst.msk [vmem:[%s203 + $0x44] sm:$0xf] %vm486, %v471
      %505 = vst.msk [vmem:[%s203 + $0x48] sm:$0xf] %vm486, %v472
      %506 = vst.msk [vmem:[%s203 + $0x4c] sm:$0xf] %vm486, %v473
      %507 = vst.msk [vmem:[%s203 + $0x50] sm:$0xf] %vm486, %v474
      %508 = vst.msk [vmem:[%s203 + $0x54] sm:$0xf] %vm486, %v475
      %509 = vst.msk [vmem:[%s203 + $0x58] sm:$0xf] %vm486, %v476
      %510 = vst.msk [vmem:[%s203 + $0x5c] sm:$0xf] %vm486, %v477
      %511 = vst.msk [vmem:[%s203 + $0x60] sm:$0xf] %vm486, %v478
      %512 = vst.msk [vmem:[%s203 + $0x64] sm:$0xf] %vm486, %v479
      %513 = vst.msk [vmem:[%s203 + $0x68] sm:$0xf] %vm486, %v480
      %514 = vst.msk [vmem:[%s203 + $0x6c] sm:$0xf] %vm486, %v481
      %515 = vst.msk [vmem:[%s203 + $0x70] sm:$0xf] %vm486, %v482
      %516 = vst.msk [vmem:[%s203 + $0x74] sm:$0xf] %vm486, %v483
      %517 = vst.msk [vmem:[%s203 + $0x78] sm:$0xf] %vm486, %v484
      %518 = vst.msk [vmem:[%s203 + $0x7c] sm:$0xf] %vm486, %v485
      %v519 = vsel %vm240, %v207, 0.0
      %v520 = vsel %vm240, %v208, 0.0
      %v521 = vadd.f32 %v519, %v520
      %v522 = vsel %vm240, %v209, 0.0
      %v523 = vadd.f32 %v521, %v522
      %v524 = vsel %vm240, %v210, 0.0
      %v525 = vadd.f32 %v523, %v524
      %v526 = vsel %vm240, %v211, 0.0
      %v527 = vadd.f32 %v525, %v526
      %v528 = vsel %vm240, %v212, 0.0
      %v529 = vadd.f32 %v527, %v528
      %v530 = vsel %vm240, %v213, 0.0
      %v531 = vadd.f32 %v529, %v530
      %v532 = vsel %vm240, %v214, 0.0
      %v533 = vadd.f32 %v531, %v532
      %v534 = vsel %vm240, %v215, 0.0
      %v535 = vadd.f32 %v533, %v534
      %v536 = vsel %vm240, %v216, 0.0
      %v537 = vadd.f32 %v535, %v536
      %v538 = vsel %vm240, %v217, 0.0
      %v539 = vadd.f32 %v537, %v538
      %v540 = vsel %vm240, %v218, 0.0
      %v541 = vadd.f32 %v539, %v540
      %v542 = vsel %vm240, %v219, 0.0
      %v543 = vadd.f32 %v541, %v542
      %v544 = vsel %vm240, %v220, 0.0
      %v545 = vadd.f32 %v543, %v544
      %v546 = vsel %vm240, %v221, 0.0
      %v547 = vadd.f32 %v545, %v546
      %v548 = vsel %vm240, %v222, 0.0
      %v549 = vadd.f32 %v547, %v548
      %v550 = vsel %vm240, %v223, 0.0
      %v551 = vadd.f32 %v549, %v550
      %v552 = vsel %vm240, %v224, 0.0
      %v553 = vadd.f32 %v551, %v552
      %v554 = vsel %vm240, %v225, 0.0
      %v555 = vadd.f32 %v553, %v554
      %v556 = vsel %vm240, %v226, 0.0
      %v557 = vadd.f32 %v555, %v556
      %v558 = vsel %vm240, %v227, 0.0
      %v559 = vadd.f32 %v557, %v558
      %v560 = vsel %vm240, %v228, 0.0
      %v561 = vadd.f32 %v559, %v560
      %v562 = vsel %vm240, %v229, 0.0
      %v563 = vadd.f32 %v561, %v562
      %v564 = vsel %vm240, %v230, 0.0
      %v565 = vadd.f32 %v563, %v564
      %v566 = vsel %vm240, %v231, 0.0
      %v567 = vadd.f32 %v565, %v566
      %v568 = vsel %vm240, %v232, 0.0
      %v569 = vadd.f32 %v567, %v568
      %v570 = vsel %vm240, %v233, 0.0
      %v571 = vadd.f32 %v569, %v570
      %v572 = vsel %vm240, %v234, 0.0
      %v573 = vadd.f32 %v571, %v572
      %v574 = vsel %vm240, %v235, 0.0
      %v575 = vadd.f32 %v573, %v574
      %v576 = vsel %vm240, %v236, 0.0
      %v577 = vadd.f32 %v575, %v576
      %v578 = vsel %vm240, %v237, 0.0
      %v579 = vadd.f32 %v577, %v578
      %v580 = vsel %vm240, %v238, 0.0
      %v581 = vadd.f32 %v579, %v580
      %v582 = vrot.slane %v581, 4
      %v583 = vadd.f32 %v581, %v582
      %v584 = vrot.slane %v583, 2
      %v585 = vadd.f32 %v583, %v584
      %v586 = vrot.slane %v585, 1
      %v587 = vadd.f32 %v585, %v586
      %v588 = vrcp.pop 256.0
      %v589 = vmul.f32 256.0, %v588
      %v590 = vsub.f32 1.0, %v589
      %v591 = vmul.f32 %v588, %v590
      %v592 = vadd.f32 %v588, %v591
      %vm593 = vweird.f32 %v588
      %v594 = vsel %vm593, %v588, %v592
      %v595 = vmul.f32 %v587, %v594
      %v596 = vld [vmem:[%s2] sm:$0xf]
      %v598 = vsel %vm240, %v595, 0
      %v601 = vsel %vm337, %v596, 0
      %603 = vmatpush.msra.mxu0 0.0
      %604 = vmatpush.msra.mxu0 0.0
      %605 = vmatpush.msra.mxu0 0.0
      %606 = vmatpush.msra.mxu0 0.0
      %607 = vmatpush.msra.mxu0 0.0
      %608 = vmatpush.msra.mxu0 0.0
      %609 = vmatpush.msra.mxu0 0.0
      %610 = vmatpush.msra.mxu0 0.0
      %611 = vmatpush.msra.mxu0 0.0
      %612 = vmatpush.msra.mxu0 0.0
      %613 = vmatpush.msra.mxu0 0.0
      %614 = vmatpush.msra.mxu0 0.0
      %615 = vmatpush.msra.mxu0 0.0
      %616 = vmatpush.msra.mxu0 0.0
      %617 = vmatpush.msra.mxu0 0.0
      %618 = vmatpush.msra.mxu0 %v601
      %619 = vmatmul.f32.gmra.mxu0 %v598
      %v620 = vpop.f32.mrf.mxu0
      %v621 = vadd.f32 0.0, %v620
      %622 = vdwg.mxu0
      %vm623 = vcmask 253952
      %624 = vst.msk [vmem:[%s206] sm:$0x1] %vm623, %v621
      %p625 = scmp.lt.s32.totalorder %s16, 1
      %s626 = scalar_select %p625, %s16, 1
      %s627 = smul.addr %s626, 32
      %s628 = smul.addr %s627, 4
      %s629 = scalar_lea.vmem %s3, %s628
      %p630 = scmp.lt.s32.totalorder %s16, 1
      %s631 = scalar_select %p630, %s16, 1
      %s632 = scalar_lea.vmem %s4, %s631
      // Predicated region
      $region33: #{damsm_forward.4} parent=31 // pred_check
        %p633 = pneg %p102
      $region34: #{damsm_forward.4} parent=31 // pred_check_branch
        %635 = sbr.rel (%p633) target = $region36
      $region35: #{damsm_forward.4} parent=31 // pred_region
        _
      $region36: #{damsm_forward.4} parent=31 // pred_fallthru
        _
      // Predicated region
      $region37: #{damsm_forward.4} parent=31 // pred_check
        %p636 = pneg %p128
      $region38: #{damsm_forward.4} parent=31 // pred_check_branch
        %638 = sbr.rel (%p636) target = $region40
      $region39: #{damsm_forward.4} parent=31 // pred_region
        _
      $region40: #{damsm_forward.4} parent=31 // pred_fallthru
        _
    $region32: #{damsm_forward.4} parent=5 // pred_fallthru
      _
    %p639 = scmp.le.s32.totalorder 2, %s11
    // Predicated region
    $region41: #{damsm_forward.4} parent=5 // pred_check
      %p640 = pneg %p639
    $region42: #{damsm_forward.4} parent=5 // pred_check_branch
      %642 = sbr.rel (%p640) target = $region44
    $region43: #{damsm_forward.4} parent=5 // pred_region
      %s643 = ssub.s32 %s11, 2
      // Predicated region
      $region45: #{damsm_forward.4} parent=43 // pred_check
        %p644 = pneg %p108
      $region46: #{damsm_forward.4} parent=43 // pred_check_branch
        %646 = sbr.rel (%p644) target = $region48
      $region47: #{damsm_forward.4} parent=43 // pred_region
        %p647 = scmp.lt.s32.totalorder %s17, 1
        %s648 = scalar_select %p647, %s17, 1
        %s649 = smul.addr %s648, 32
        %s650 = smul.addr %s649, 4
        %s651 = scalar_lea.vmem %s3, %s650
      $region48: #{damsm_forward.4} parent=43 // pred_fallthru
        _
      // Predicated region
      $region49: #{damsm_forward.4} parent=43 // pred_check
        %p652 = pneg %p134
      $region50: #{damsm_forward.4} parent=43 // pred_check_branch
        %654 = sbr.rel (%p652) target = $region52
      $region51: #{damsm_forward.4} parent=43 // pred_region
        %p655 = scmp.lt.s32.totalorder %s17, 1
        %s656 = scalar_select %p655, %s17, 1
        %s657 = scalar_lea.vmem %s4, %s656
      $region52: #{damsm_forward.4} parent=43 // pred_fallthru
        _
    $region44: #{damsm_forward.4} parent=5 // pred_fallthru
      _
  $region6: #{damsm_forward.4} parent=0 // loop_footer
    %s15 = sadd.s32 1, %s11
  $region7: #{damsm_forward.4} parent=0 // loop_footer_branch
    %10 = sbr.rel target = $region3
  $region8: #{damsm_forward.4} parent=0 // loop_exit
    _

// kernel: damsm_forward.6
$region0: #{damsm_forward.6}
  #allocation0 [shape = 'u32[]', space=smem, size = 0x4, offset = 0x4, fixed_abs, tag = 'smem constant byte address 0x4 - core index']
  #allocation1 [shape = 'u32[72,128]{1,0:T(1,128)}', space=vmem, size = 0x9000, scoped, tag = 'internal scratch']
  #allocation2 [shape = 's32[1]{0}', space=sflag, size = 0x4, scoped, tag = 'scoped memory for damsm_forward.6']
  #allocation3 [shape = 'u8[512]{0}', space=smem, size = 0x200, scoped, tag = 'prefetched SMEM operand 0']
  %s0 = inlined_call_operand.vmem [shape: s32[2], index: 0, kind: input, shape index: {}]
  %s1 = inlined_call_operand.vmem [shape: bf16[2,256,32], index: 1, kind: input, shape index: {}]
  %s2 = inlined_call_operand.vmem [shape: bf16[2,8,32], index: 2, kind: input, shape index: {}]
  %s3 = inlined_call_operand.vmem [shape: f32[2,1,8], index: 3, kind: input, shape index: {}]
  %s4 = inlined_call_operand.vmem [shape: f32[2,1,2], index: 4, kind: output, shape index: {}]
  %s5 = sld [smem:[#allocation0]]
  $region45: #{damsm_forward.6} parent=0
    _
  %s7 = ssub.s32 1, %s5
  %s8 = scalar_select 0, %s7, %s5
  %s10 = sshll.u32 %s0, 4
  %s11 = int_to_ptr.vmem [resolvable:$true] %s10
  %13 = dma.vmem_to_smem %s11, 16, [#allocation3], [#allocation2]
  %15 = dma.done [#allocation2], 16
  %16 = sfence
  loop: start=0, step=1, limit=4
  $region2: #{damsm_forward.6} parent=0 // loop_pre_header
    _
  $region3: #{damsm_forward.6} parent=0 // loop_header
    %s18 = sphi 0, %s22
    %p19 = scmp.ge.s32.totalorder %s18, 4
    %s25 = sphi 0, %s37
    %s26 = sphi 0, %s33
    %s27 = sphi 0, %s25
    %s28 = sphi 0, %s26
    %s29 = sphi 0, %s27
    %s30 = sphi 0, %s28
    %s40 = sphi 0, %s42
    %s43 = sphi 0, %s40
    %s44 = sphi 0, %s43
    %s60 = sphi 0, %s44
    %s66 = sphi 0, %s68
    %s69 = sphi 0, %s66
    %s70 = sphi 0, %s69
    %s86 = sphi 0, %s70
    %s92 = sphi 0, %s94
    %s95 = sphi 0, %s92
    %s96 = sphi 0, %s95
    %s112 = sphi 0, %s96
    %s120 = sphi 0, %s122
    %s123 = sphi 0, %s120
    %s124 = sphi 0, %s123
    %s140 = sphi 0, %s124
  $region4: #{damsm_forward.6} parent=0 // loop_header_branch
    %21 = sbr.rel (%p19) target = $region8
  $region5: #{damsm_forward.6} parent=0 // loop_body
    %s23 = ssub.s32 %s18, 1
    %s24 = ssub.s32 %s18, 2
    %s31 = sadd.s32 1, %s26
    %p32 = scmp.ge.s32.totalorder %s31, 2
    %s33 = scalar_select %p32, 0, %s31
    %s34 = sadd.s32 1, %s25
    %s35 = scalar_select %p32, %s34, %s25
    %p36 = scmp.ge.s32.totalorder %s35, 1
    %s37 = scalar_select %p36, 0, %s35
    %s38 = ssub.s32 %s25, %s37
    %p39 = scmp.eq.s32.totalorder %s38, 0
    %s41 = sadd.s32 %s40, 1
    %s42 = scalar_select %p39, %s40, %s41
    %p45 = pneg %p39
    %p46 = scmp.eq.s32.totalorder %s18, 1
    %p47 = por %p45, %p46
    %p48 = scmp.ne.s32.totalorder %s40, %s43
    %p49 = scmp.eq.s32.totalorder %s18, 0
    %p50 = por %p48, %p49
    %p51 = scmp.ne.s32.totalorder %s40, %s43
    %p52 = scmp.eq.s32.totalorder %s23, 1
    %p53 = por %p51, %p52
    %p54 = scmp.ne.s32.totalorder %s43, %s44
    %p55 = scmp.eq.s32.totalorder %s23, 0
    %p56 = por %p54, %p55
    %p57 = scmp.ne.s32.totalorder %s43, %s44
    %p58 = scmp.eq.s32.totalorder %s24, 1
    %p59 = por %p57, %p58
    %p61 = scmp.ne.s32.totalorder %s44, %s60
    %p62 = scmp.eq.s32.totalorder %s24, 0
    %p63 = por %p61, %p62
    %s64 = ssub.s32 %s26, %s33
    %p65 = scmp.eq.s32.totalorder %s64, 0
    %s67 = sadd.s32 %s66, 1
    %s68 = scalar_select %p65, %s66, %s67
    %p71 = pneg %p65
    %p72 = scmp.eq.s32.totalorder %s18, 1
    %p73 = por %p71, %p72
    %p74 = scmp.ne.s32.totalorder %s66, %s69
    %p75 = scmp.eq.s32.totalorder %s18, 0
    %p76 = por %p74, %p75
    %p77 = scmp.ne.s32.totalorder %s66, %s69
    %p78 = scmp.eq.s32.totalorder %s23, 1
    %p79 = por %p77, %p78
    %p80 = scmp.ne.s32.totalorder %s69, %s70
    %p81 = scmp.eq.s32.totalorder %s23, 0
    %p82 = por %p80, %p81
    %p83 = scmp.ne.s32.totalorder %s69, %s70
    %p84 = scmp.eq.s32.totalorder %s24, 1
    %p85 = por %p83, %p84
    %p87 = scmp.ne.s32.totalorder %s70, %s86
    %p88 = scmp.eq.s32.totalorder %s24, 0
    %p89 = por %p87, %p88
    %s90 = ssub.s32 %s26, %s33
    %p91 = scmp.eq.s32.totalorder %s90, 0
    %s93 = sadd.s32 %s92, 1
    %s94 = scalar_select %p91, %s92, %s93
    %p97 = pneg %p91
    %p98 = scmp.eq.s32.totalorder %s18, 1
    %p99 = por %p97, %p98
    %p100 = scmp.ne.s32.totalorder %s92, %s95
    %p101 = scmp.eq.s32.totalorder %s18, 0
    %p102 = por %p100, %p101
    %p103 = scmp.ne.s32.totalorder %s92, %s95
    %p104 = scmp.eq.s32.totalorder %s23, 1
    %p105 = por %p103, %p104
    %p106 = scmp.ne.s32.totalorder %s95, %s96
    %p107 = scmp.eq.s32.totalorder %s23, 0
    %p108 = por %p106, %p107
    %p109 = scmp.ne.s32.totalorder %s95, %s96
    %p110 = scmp.eq.s32.totalorder %s24, 1
    %p111 = por %p109, %p110
    %p113 = scmp.ne.s32.totalorder %s96, %s112
    %p114 = scmp.eq.s32.totalorder %s24, 0
    %p115 = por %p113, %p114
    %s116 = ssub.s32 %s26, %s33
    %s117 = ssub.s32 %s25, %s37
    %s118 = sor.u32 %s116, %s117
    %p119 = scmp.eq.s32.totalorder %s118, 0
    %s121 = sadd.s32 %s120, 1
    %s122 = scalar_select %p119, %s120, %s121
    %p125 = pneg %p119
    %p126 = scmp.eq.s32.totalorder %s18, 1
    %p127 = por %p125, %p126
    %p128 = scmp.ne.s32.totalorder %s120, %s123
    %p129 = scmp.eq.s32.totalorder %s18, 0
    %p130 = por %p128, %p129
    %p131 = scmp.ne.s32.totalorder %s120, %s123
    %p132 = scmp.eq.s32.totalorder %s23, 1
    %p133 = por %p131, %p132
    %p134 = scmp.ne.s32.totalorder %s123, %s124
    %p135 = scmp.eq.s32.totalorder %s23, 0
    %p136 = por %p134, %p135
    %p137 = scmp.ne.s32.totalorder %s123, %s124
    %p138 = scmp.eq.s32.totalorder %s24, 1
    %p139 = por %p137, %p138
    %p141 = scmp.ne.s32.totalorder %s124, %s140
    %p142 = scmp.eq.s32.totalorder %s24, 0
    %p143 = por %p141, %p142
    %p144 = scmp.le.s32.totalorder 1, %s18
    %p145 = scmp.lt.s32.totalorder %s18, 3
    %p146 = pnand %p144, %p145
    %p147 = pneg %p146
    // Predicated region
    $region9: #{damsm_forward.6} parent=5 // pred_check
      _
    $region10: #{damsm_forward.6} parent=5 // pred_check_branch
      %149 = sbr.rel (%p146) target = $region12
    $region11: #{damsm_forward.6} parent=5 // pred_region
      %s150 = ssub.s32 %s18, 1
      // Predicated region
      $region13: #{damsm_forward.6} parent=11 // pred_check
        %p151 = pneg %p56
      $region14: #{damsm_forward.6} parent=11 // pred_check_branch
        %153 = sbr.rel (%p151) target = $region16
      $region15: #{damsm_forward.6} parent=11 // pred_region
        %s154 = smul.u32 2, %s27
        %p155 = scmp.lt.s32.totalorder %s154, 1
        %s156 = scalar_select %p155, %s154, 1
        %s157 = smul.addr %s156, 32
        %s158 = smul.addr %s157, 4
        %s159 = scalar_lea.vmem %s1, %s158
        %s160 = smul.u32 2, %s27
      $region16: #{damsm_forward.6} parent=11 // pred_fallthru
        _
    $region12: #{damsm_forward.6} parent=5 // pred_fallthru
      _
    %p161 = scmp.lt.s32.totalorder %s18, 2
    // Predicated region
    $region17: #{damsm_forward.6} parent=5 // pred_check
      %p162 = pneg %p161
    $region18: #{damsm_forward.6} parent=5 // pred_check_branch
      %164 = sbr.rel (%p162) target = $region20
    $region19: #{damsm_forward.6} parent=5 // pred_region
      // Predicated region
      $region21: #{damsm_forward.6} parent=19 // pred_check
        %p165 = pneg %p76
      $region22: #{damsm_forward.6} parent=19 // pred_check_branch
        %167 = sbr.rel (%p165) target = $region24
      $region23: #{damsm_forward.6} parent=19 // pred_region
        %p168 = scmp.lt.s32.totalorder %s26, 1
        %s169 = scalar_select %p168, %s26, 1
        %s170 = smul.addr %s169, 4
        %s171 = scalar_lea.vmem %s2, %s170
      $region24: #{damsm_forward.6} parent=19 // pred_fallthru
        _
      // Predicated region
      $region25: #{damsm_forward.6} parent=19 // pred_check
        %p172 = pneg %p102
      $region26: #{damsm_forward.6} parent=19 // pred_check_branch
        %174 = sbr.rel (%p172) target = $region28
      $region27: #{damsm_forward.6} parent=19 // pred_region
        %p175 = scmp.lt.s32.totalorder %s26, 1
        %s176 = scalar_select %p175, %s26, 1
        %s177 = scalar_lea.vmem %s3, %s176
      $region28: #{damsm_forward.6} parent=19 // pred_fallthru
        _
    $region20: #{damsm_forward.6} parent=5 // pred_fallthru
      _
    %p178 = scmp.le.s32.totalorder 1, %s18
    %p179 = scmp.lt.s32.totalorder %s18, 3
    %p180 = pnand %p178, %p179
    %p181 = pneg %p180
    // Predicated region
    $region29: #{damsm_forward.6} parent=5 // pred_check
      _
    $region30: #{damsm_forward.6} parent=5 // pred_check_branch
      %183 = sbr.rel (%p180) target = $region32
    $region31: #{damsm_forward.6} parent=5 // pred_region
      %s184 = ssub.s32 %s18, 1
      %s185 = smul.u32 2, %s27
      %p186 = scmp.lt.s32.totalorder %s185, 1
      %s187 = scalar_select %p186, %s185, 1
      %s188 = smul.addr %s187, 32
      %s189 = smul.addr %s188, 4
      %s190 = scalar_lea.vmem %s1, %s189
      %p191 = pneg %p56
      %p192 = pneg %p53
      %p193 = scmp.lt.s32.totalorder %s28, 1
      %s194 = scalar_select %p193, %s28, 1
      %s195 = smul.addr %s194, 4
      %s196 = scalar_lea.vmem %s2, %s195
      %p197 = pneg %p82
      %p198 = pneg %p79
      %p199 = scmp.lt.s32.totalorder %s28, 1
      %s200 = scalar_select %p199, %s28, 1
      %s201 = scalar_lea.vmem %s3, %s200
      %p202 = pneg %p108
      %p203 = pneg %p105
      %p204 = pneg %p136
      %p205 = pneg %p133
      %p206 = scmp.lt.s32.totalorder %s28, 1
      %s207 = scalar_select %p206, %s28, 1
      %p208 = scmp.lt.s32.totalorder %s27, 0
      %s209 = scalar_select %p208, %s27, 0
      %s210 = sadd.s32 %s209, %s207
      %s211 = scalar_lea.vmem %s4, %s210
      %s212 = smul.u32 2, %s27
      %p213 = scmp.lt.s32.totalorder %s212, 1
      %s214 = scalar_select %p213, %s212, 1
      %s215 = smul.addr %s214, 32
      %s216 = smul.addr %s215, 4
      %s217 = scalar_lea.vmem %s1, %s216
      %s218 = smul.u32 2, %s27
      %p219 = scmp.lt.s32.totalorder %s28, 1
      %s220 = scalar_select %p219, %s28, 1
      %s221 = smul.addr %s220, 4
      %s222 = scalar_lea.vmem %s2, %s221
      %p223 = scmp.lt.s32.totalorder %s28, 1
      %s224 = scalar_select %p223, %s28, 1
      %s225 = scalar_lea.vmem %s3, %s224
      %p226 = scmp.lt.s32.totalorder %s28, 1
      %s227 = scalar_select %p226, %s28, 1
      %p228 = scmp.lt.s32.totalorder %s27, 0
      %s229 = scalar_select %p228, %s27, 0
      %s230 = sadd.s32 %s229, %s227
      %s231 = scalar_lea.vmem %s4, %s230
      %s232 = sld [smem:[#allocation3 + %s28]]
      %v233 = vld [vmem:[%s217] sm:$0xf]
      %v234 = vld [vmem:[%s217 + $0x4] sm:$0xf]
      %v235 = vld [vmem:[%s217 + $0x8] sm:$0xf]
      %v236 = vld [vmem:[%s217 + $0xc] sm:$0xf]
      %v237 = vld [vmem:[%s217 + $0x10] sm:$0xf]
      %v238 = vld [vmem:[%s217 + $0x14] sm:$0xf]
      %v239 = vld [vmem:[%s217 + $0x18] sm:$0xf]
      %v240 = vld [vmem:[%s217 + $0x1c] sm:$0xf]
      %v241 = vld [vmem:[%s217 + $0x20] sm:$0xf]
      %v242 = vld [vmem:[%s217 + $0x24] sm:$0xf]
      %v243 = vld [vmem:[%s217 + $0x28] sm:$0xf]
      %v244 = vld [vmem:[%s217 + $0x2c] sm:$0xf]
      %v245 = vld [vmem:[%s217 + $0x30] sm:$0xf]
      %v246 = vld [vmem:[%s217 + $0x34] sm:$0xf]
      %v247 = vld [vmem:[%s217 + $0x38] sm:$0xf]
      %v248 = vld [vmem:[%s217 + $0x3c] sm:$0xf]
      %v249 = vld [vmem:[%s217 + $0x40] sm:$0xf]
      %v250 = vld [vmem:[%s217 + $0x44] sm:$0xf]
      %v251 = vld [vmem:[%s217 + $0x48] sm:$0xf]
      %v252 = vld [vmem:[%s217 + $0x4c] sm:$0xf]
      %v253 = vld [vmem:[%s217 + $0x50] sm:$0xf]
      %v254 = vld [vmem:[%s217 + $0x54] sm:$0xf]
      %v255 = vld [vmem:[%s217 + $0x58] sm:$0xf]
      %v256 = vld [vmem:[%s217 + $0x5c] sm:$0xf]
      %v257 = vld [vmem:[%s217 + $0x60] sm:$0xf]
      %v258 = vld [vmem:[%s217 + $0x64] sm:$0xf]
      %v259 = vld [vmem:[%s217 + $0x68] sm:$0xf]
      %v260 = vld [vmem:[%s217 + $0x6c] sm:$0xf]
      %v261 = vld [vmem:[%s217 + $0x70] sm:$0xf]
      %v262 = vld [vmem:[%s217 + $0x74] sm:$0xf]
      %v263 = vld [vmem:[%s217 + $0x78] sm:$0xf]
      %v264 = vld [vmem:[%s217 + $0x7c] sm:$0xf]
      %v265 = vld [vmem:[%s217 + $0x80] sm:$0xf]
      %v266 = vld [vmem:[%s217 + $0x84] sm:$0xf]
      %v267 = vld [vmem:[%s217 + $0x88] sm:$0xf]
      %v268 = vld [vmem:[%s217 + $0x8c] sm:$0xf]
      %v269 = vld [vmem:[%s217 + $0x90] sm:$0xf]
      %v270 = vld [vmem:[%s217 + $0x94] sm:$0xf]
      %v271 = vld [vmem:[%s217 + $0x98] sm:$0xf]
      %v272 = vld [vmem:[%s217 + $0x9c] sm:$0xf]
      %v273 = vld [vmem:[%s217 + $0xa0] sm:$0xf]
      %v274 = vld [vmem:[%s217 + $0xa4] sm:$0xf]
      %v275 = vld [vmem:[%s217 + $0xa8] sm:$0xf]
      %v276 = vld [vmem:[%s217 + $0xac] sm:$0xf]
      %v277 = vld [vmem:[%s217 + $0xb0] sm:$0xf]
      %v278 = vld [vmem:[%s217 + $0xb4] sm:$0xf]
      %v279 = vld [vmem:[%s217 + $0xb8] sm:$0xf]
      %v280 = vld [vmem:[%s217 + $0xbc] sm:$0xf]
      %v281 = vld [vmem:[%s217 + $0xc0] sm:$0xf]
      %v282 = vld [vmem:[%s217 + $0xc4] sm:$0xf]
      %v283 = vld [vmem:[%s217 + $0xc8] sm:$0xf]
      %v284 = vld [vmem:[%s217 + $0xcc] sm:$0xf]
      %v285 = vld [vmem:[%s217 + $0xd0] sm:$0xf]
      %v286 = vld [vmem:[%s217 + $0xd4] sm:$0xf]
      %v287 = vld [vmem:[%s217 + $0xd8] sm:$0xf]
      %v288 = vld [vmem:[%s217 + $0xdc] sm:$0xf]
      %v289 = vld [vmem:[%s217 + $0xe0] sm:$0xf]
      %v290 = vld [vmem:[%s217 + $0xe4] sm:$0xf]
      %v291 = vld [vmem:[%s217 + $0xe8] sm:$0xf]
      %v292 = vld [vmem:[%s217 + $0xec] sm:$0xf]
      %v293 = vld [vmem:[%s217 + $0xf0] sm:$0xf]
      %v294 = vld [vmem:[%s217 + $0xf4] sm:$0xf]
      %v295 = vld [vmem:[%s217 + $0xf8] sm:$0xf]
      %v296 = vld [vmem:[%s217 + $0xfc] sm:$0xf]
      %v297 = vld [vmem:[%s222] sm:$0xf]
      %v298 = vld [vmem:[%s225] sm:$0x1]
      %v331 = vunpack.c.l.b16 %v233
      %v332 = vunpack.c.l.b16 %v234
      %v333 = vunpack.c.l.b16 %v235
      %v334 = vunpack.c.l.b16 %v236
      %v335 = vunpack.c.l.b16 %v237
      %v336 = vunpack.c.l.b16 %v238
      %v337 = vunpack.c.l.b16 %v239
      %v338 = vunpack.c.l.b16 %v240
      %v339 = vunpack.c.l.b16 %v241
      %v340 = vunpack.c.l.b16 %v242
      %v341 = vunpack.c.l.b16 %v243
      %v342 = vunpack.c.l.b16 %v244
      %v343 = vunpack.c.l.b16 %v245
      %v344 = vunpack.c.l.b16 %v246
      %v345 = vunpack.c.l.b16 %v247
      %v346 = vunpack.c.l.b16 %v248
      %v347 = vunpack.c.l.b16 %v249
      %v348 = vunpack.c.l.b16 %v250
      %v349 = vunpack.c.l.b16 %v251
      %v350 = vunpack.c.l.b16 %v252
      %v351 = vunpack.c.l.b16 %v253
      %v352 = vunpack.c.l.b16 %v254
      %v353 = vunpack.c.l.b16 %v255
      %v354 = vunpack.c.l.b16 %v256
      %v355 = vunpack.c.l.b16 %v257
      %v356 = vunpack.c.l.b16 %v258
      %v357 = vunpack.c.l.b16 %v259
      %v358 = vunpack.c.l.b16 %v260
      %v359 = vunpack.c.l.b16 %v261
      %v360 = vunpack.c.l.b16 %v262
      %v361 = vunpack.c.l.b16 %v263
      %v362 = vunpack.c.l.b16 %v264
      %v363 = vpack.c.b16 %v332, %v331
      %v364 = vpack.c.b16 %v334, %v333
      %v365 = vpack.c.b16 %v336, %v335
      %v366 = vpack.c.b16 %v338, %v337
      %v367 = vpack.c.b16 %v340, %v339
      %v368 = vpack.c.b16 %v342, %v341
      %v369 = vpack.c.b16 %v344, %v343
      %v370 = vpack.c.b16 %v346, %v345
      %v371 = vpack.c.b16 %v348, %v347
      %v372 = vpack.c.b16 %v350, %v349
      %v373 = vpack.c.b16 %v352, %v351
      %v374 = vpack.c.b16 %v354, %v353
      %v375 = vpack.c.b16 %v356, %v355
      %v376 = vpack.c.b16 %v358, %v357
      %v377 = vpack.c.b16 %v360, %v359
      %v378 = vpack.c.b16 %v362, %v361
      %vm379 = vcmask 261120
      %v381 = vsel %vm379, %v297, 0
      %v384 = vsel %vm379, %v363, 0
      %v387 = vsel %vm379, %v364, 0
      %v390 = vsel %vm379, %v365, 0
      %v393 = vsel %vm379, %v366, 0
      %v396 = vsel %vm379, %v367, 0
      %v399 = vsel %vm379, %v368, 0
      %v402 = vsel %vm379, %v369, 0
      %v405 = vsel %vm379, %v370, 0
      %v408 = vsel %vm379, %v371, 0
      %v411 = vsel %vm379, %v372, 0
      %v414 = vsel %vm379, %v373, 0
      %v417 = vsel %vm379, %v374, 0
      %v420 = vsel %vm379, %v375, 0
      %v423 = vsel %vm379, %v376, 0
      %v426 = vsel %vm379, %v377, 0
      %v429 = vsel %vm379, %v378, 0
      %431 = vmatpush.bf16.xpose.msra.mxu0 %v405
      %432 = vmatpush.bf16.xpose.msra.mxu0 %v402
      %433 = vmatpush.bf16.xpose.msra.mxu0 %v399
      %434 = vmatpush.bf16.xpose.msra.mxu0 %v396
      %435 = vmatpush.bf16.xpose.msra.mxu0 %v393
      %436 = vmatpush.bf16.xpose.msra.mxu0 %v390
      %437 = vmatpush.bf16.xpose.msra.mxu0 %v387
      %438 = vmatpush.bf16.xpose.msra.mxu0 %v384
      %439 = vmatmul.bf16.gmra.mxu0 %v381
      %v440 = vpop.f32.mrf.mxu0
      %v441 = vadd.f32 0.0, %v440
      %v442 = vpop.f32.mrf.mxu0
      %443 = vdwg.mxu0
      %444 = vmatpush.bf16.xpose.msra.mxu0 %v429
      %445 = vmatpush.bf16.xpose.msra.mxu0 %v426
      %446 = vmatpush.bf16.xpose.msra.mxu0 %v423
      %447 = vmatpush.bf16.xpose.msra.mxu0 %v420
      %448 = vmatpush.bf16.xpose.msra.mxu0 %v417
      %449 = vmatpush.bf16.xpose.msra.mxu0 %v414
      %450 = vmatpush.bf16.xpose.msra.mxu0 %v411
      %451 = vmatpush.bf16.xpose.msra.mxu0 %v408
      %452 = vmatmul.bf16.gmra.mxu0 %v381
      %v453 = vpop.f32.mrf.mxu0
      %v454 = vadd.f32 0.0, %v453
      %v455 = vpop.f32.mrf.mxu0
      %456 = vdwg.mxu0
      %v489 = vunpack.c.l.b16 %v265
      %v490 = vunpack.c.l.b16 %v266
      %v491 = vunpack.c.l.b16 %v267
      %v492 = vunpack.c.l.b16 %v268
      %v493 = vunpack.c.l.b16 %v269
      %v494 = vunpack.c.l.b16 %v270
      %v495 = vunpack.c.l.b16 %v271
      %v496 = vunpack.c.l.b16 %v272
      %v497 = vunpack.c.l.b16 %v273
      %v498 = vunpack.c.l.b16 %v274
      %v499 = vunpack.c.l.b16 %v275
      %v500 = vunpack.c.l.b16 %v276
      %v501 = vunpack.c.l.b16 %v277
      %v502 = vunpack.c.l.b16 %v278
      %v503 = vunpack.c.l.b16 %v279
      %v504 = vunpack.c.l.b16 %v280
      %v505 = vunpack.c.l.b16 %v281
      %v506 = vunpack.c.l.b16 %v282
      %v507 = vunpack.c.l.b16 %v283
      %v508 = vunpack.c.l.b16 %v284
      %v509 = vunpack.c.l.b16 %v285
      %v510 = vunpack.c.l.b16 %v286
      %v511 = vunpack.c.l.b16 %v287
      %v512 = vunpack.c.l.b16 %v288
      %v513 = vunpack.c.l.b16 %v289
      %v514 = vunpack.c.l.b16 %v290
      %v515 = vunpack.c.l.b16 %v291
      %v516 = vunpack.c.l.b16 %v292
      %v517 = vunpack.c.l.b16 %v293
      %v518 = vunpack.c.l.b16 %v294
      %v519 = vunpack.c.l.b16 %v295
      %v520 = vunpack.c.l.b16 %v296
      %v521 = vpack.c.b16 %v490, %v489
      %v522 = vpack.c.b16 %v492, %v491
      %v523 = vpack.c.b16 %v494, %v493
      %v524 = vpack.c.b16 %v496, %v495
      %v525 = vpack.c.b16 %v498, %v497
      %v526 = vpack.c.b16 %v500, %v499
      %v527 = vpack.c.b16 %v502, %v501
      %v528 = vpack.c.b16 %v504, %v503
      %v529 = vpack.c.b16 %v506, %v505
      %v530 = vpack.c.b16 %v508, %v507
      %v531 = vpack.c.b16 %v510, %v509
      %v532 = vpack.c.b16 %v512, %v511
      %v533 = vpack.c.b16 %v514, %v513
      %v534 = vpack.c.b16 %v516, %v515
      %v535 = vpack.c.b16 %v518, %v517
      %v536 = vpack.c.b16 %v520, %v519
      %v538 = vsel %vm379, %v521, 0
      %v541 = vsel %vm379, %v522, 0
      %v544 = vsel %vm379, %v523, 0
      %v547 = vsel %vm379, %v524, 0
      %v550 = vsel %vm379, %v525, 0
      %v553 = vsel %vm379, %v526, 0
      %v556 = vsel %vm379, %v527, 0
      %v559 = vsel %vm379, %v528, 0
      %v562 = vsel %vm379, %v529, 0
      %v565 = vsel %vm379, %v530, 0
      %v568 = vsel %vm379, %v531, 0
      %v571 = vsel %vm379, %v532, 0
      %v574 = vsel %vm379, %v533, 0
      %v577 = vsel %vm379, %v534, 0
      %v580 = vsel %vm379, %v535, 0
      %v583 = vsel %vm379, %v536, 0
      %585 = vmatpush.bf16.xpose.msra.mxu0 %v559
      %586 = vmatpush.bf16.xpose.msra.mxu0 %v556
      %587 = vmatpush.bf16.xpose.msra.mxu0 %v553
      %588 = vmatpush.bf16.xpose.msra.mxu0 %v550
      %589 = vmatpush.bf16.xpose.msra.mxu0 %v547
      %590 = vmatpush.bf16.xpose.msra.mxu0 %v544
      %591 = vmatpush.bf16.xpose.msra.mxu0 %v541
      %592 = vmatpush.bf16.xpose.msra.mxu0 %v538
      %593 = vmatmul.bf16.gmra.mxu0 %v381
      %v594 = vpop.f32.mrf.mxu0
      %v595 = vadd.f32 0.0, %v594
      %v596 = vpop.f32.mrf.mxu0
      %597 = vdwg.mxu0
      %598 = vmatpush.bf16.xpose.msra.mxu0 %v583
      %599 = vmatpush.bf16.xpose.msra.mxu0 %v580
      %600 = vmatpush.bf16.xpose.msra.mxu0 %v577
      %601 = vmatpush.bf16.xpose.msra.mxu0 %v574
      %602 = vmatpush.bf16.xpose.msra.mxu0 %v571
      %603 = vmatpush.bf16.xpose.msra.mxu0 %v568
      %604 = vmatpush.bf16.xpose.msra.mxu0 %v565
      %605 = vmatpush.bf16.xpose.msra.mxu0 %v562
      %606 = vmatmul.bf16.gmra.mxu0 %v381
      %v607 = vpop.f32.mrf.mxu0
      %v608 = vadd.f32 0.0, %v607
      %v609 = vpop.f32.mrf.mxu0
      %610 = vdwg.mxu0
      %v611 = vlaneseq
      %v612 = vshrl.u32 %v611, 7
      %v613 = vstv %s232
      %vm614 = vcmp.lt.s32.totalorder %v612, %v613
      %v615 = vsel %vm614, 1, 0
      %vm616 = vcmp.eq.s32.totalorder %v615, 1
      %v617 = vsel %vm616, %v441, -1e+09
      %v618 = vsel %vm616, %v454, -1e+09
      %v619 = vsel %vm616, %v595, -1e+09
      %v620 = vsel %vm616, %v608, -1e+09
      %v621 = vrot.slane %v617, 4
      %v622 = vmax.f32 %v617, %v621
      %v623 = vrot.slane %v622, 2
      %v624 = vmax.f32 %v622, %v623
      %v625 = vrot.slane %v624, 1
      %v626 = vmax.f32 %v624, %v625
      %v627 = vrot.slane %v618, 4
      %v628 = vmax.f32 %v618, %v627
      %v629 = vrot.slane %v628, 2
      %v630 = vmax.f32 %v628, %v629
      %v631 = vrot.slane %v630, 1
      %v632 = vmax.f32 %v630, %v631
      %v633 = vrot.slane %v619, 4
      %v634 = vmax.f32 %v619, %v633
      %v635 = vrot.slane %v634, 2
      %v636 = vmax.f32 %v634, %v635
      %v637 = vrot.slane %v636, 1
      %v638 = vmax.f32 %v636, %v637
      %v639 = vrot.slane %v620, 4
      %v640 = vmax.f32 %v620, %v639
      %v641 = vrot.slane %v640, 2
      %v642 = vmax.f32 %v640, %v641
      %v643 = vrot.slane %v642, 1
      %v644 = vmax.f32 %v642, %v643
      %v645 = vsub.f32 %v617, %v626
      %v646 = vsub.f32 %v618, %v632
      %v647 = vsub.f32 %v619, %v638
      %v648 = vsub.f32 %v620, %v644
      %v649 = vmul.f32 %v645, 1.442695
      %v650 = vpow.pop %v649
      %v651 = vmul.f32 %v646, 1.442695
      %v652 = vpow.pop %v651
      %v653 = vmul.f32 %v647, 1.442695
      %v654 = vpow.pop %v653
      %v655 = vmul.f32 %v648, 1.442695
      %v656 = vpow.pop %v655
      %v657 = vrot.slane %v650, 4
      %v658 = vadd.f32 %v650, %v657
      %v659 = vrot.slane %v658, 2
      %v660 = vadd.f32 %v658, %v659
      %v661 = vrot.slane %v660, 1
      %v662 = vadd.f32 %v660, %v661
      %v663 = vrot.slane %v652, 4
      %v664 = vadd.f32 %v652, %v663
      %v665 = vrot.slane %v664, 2
      %v666 = vadd.f32 %v664, %v665
      %v667 = vrot.slane %v666, 1
      %v668 = vadd.f32 %v666, %v667
      %v669 = vrot.slane %v654, 4
      %v670 = vadd.f32 %v654, %v669
      %v671 = vrot.slane %v670, 2
      %v672 = vadd.f32 %v670, %v671
      %v673 = vrot.slane %v672, 1
      %v674 = vadd.f32 %v672, %v673
      %v675 = vrot.slane %v656, 4
      %v676 = vadd.f32 %v656, %v675
      %v677 = vrot.slane %v676, 2
      %v678 = vadd.f32 %v676, %v677
      %v679 = vrot.slane %v678, 1
      %v680 = vadd.f32 %v678, %v679
      %v681 = vrcp.pop %v662
      %v682 = vrcp.pop %v668
      %v683 = vrcp.pop %v674
      %v684 = vrcp.pop %v680
      %v685 = vmul.f32 %v650, %v681
      %v686 = vmul.f32 %v652, %v682
      %v687 = vmul.f32 %v654, %v683
      %v688 = vmul.f32 %v656, %v684
      %v689 = vmul.f32 %v685, 4.0
      %v690 = vmul.f32 %v686, 4.0
      %v691 = vmul.f32 %v687, 4.0
      %v692 = vmul.f32 %v688, 4.0
      %v693 = vmax.f32 %v689, %v690
      %694 = vmax.xlane.f32.xlu0 %v693
      %v695 = vpop.xlane.xlu0 %694
      %v696 = vmax.f32 %v691, %v692
      %697 = vmax.xlane.f32.xlu0 %v696
      %v698 = vpop.xlane.xlu0 %697
      %v699 = vsub.f32 %v689, %v695
      %v700 = vsub.f32 %v690, %v695
      %v701 = vsub.f32 %v691, %v698
      %v702 = vsub.f32 %v692, %v698
      %v703 = vmul.f32 %v699, 1.442695
      %v704 = vpow.pop %v703
      %v705 = vmul.f32 %v700, 1.442695
      %v706 = vpow.pop %v705
      %v707 = vmul.f32 %v701, 1.442695
      %v708 = vpow.pop %v707
      %v709 = vmul.f32 %v702, 1.442695
      %v710 = vpow.pop %v709
      %v711 = vadd.f32 %v704, %v706
      %712 = vadd.xlane.f32.xlu0 %v711
      %v713 = vpop.xlane.xlu0 %712
      %v714 = vadd.f32 %v708, %v710
      %715 = vadd.xlane.f32.xlu0 %v714
      %v716 = vpop.xlane.xlu0 %715
      %v717 = vrcp.pop %v713
      %v718 = vrcp.pop %v716
      %v719 = vmul.f32 %v704, %v717
      %v720 = vmul.f32 %v706, %v717
      %v721 = vmul.f32 %v708, %v718
      %v722 = vmul.f32 %v710, %v718
      %v723 = vpack.c.bf16 %v720, %v719
      %v724 = vpack.c.bf16 %v722, %v721
      %v726 = vunpack.c.l.b16 %v723
      %v727 = vunpack.c.h.b16 %v723
      %v728 = vpack.c.b16 %v726, %v726
      %v729 = vpack.c.b16 %v727, %v727
      %748 = vmatpush.bf16.msra.mxu0 %v370
      %749 = vmatpush.bf16.msra.mxu0 %v369
      %750 = vmatpush.bf16.msra.mxu0 %v368
      %751 = vmatpush.bf16.msra.mxu0 %v367
      %752 = vmatpush.bf16.msra.mxu0 %v366
      %753 = vmatpush.bf16.msra.mxu0 %v365
      %754 = vmatpush.bf16.msra.mxu0 %v364
      %755 = vmatpush.bf16.msra.mxu0 %v363
      %756 = vmatmul.bf16.gmra.mxu0 %v728
      %v757 = vpop.f32.mrf.mxu0
      %v758 = vadd.f32 0.0, %v757
      %v759 = vpop.f32.mrf.mxu0
      %760 = vdwg.mxu0
      %761 = vmatpush.bf16.msra.mxu0 %v378
      %762 = vmatpush.bf16.msra.mxu0 %v377
      %763 = vmatpush.bf16.msra.mxu0 %v376
      %764 = vmatpush.bf16.msra.mxu0 %v375
      %765 = vmatpush.bf16.msra.mxu0 %v374
      %766 = vmatpush.bf16.msra.mxu0 %v373
      %767 = vmatpush.bf16.msra.mxu0 %v372
      %768 = vmatpush.bf16.msra.mxu0 %v371
      %769 = vmatmul.bf16.gmra.mxu0 %v729
      %v770 = vpop.f32.mrf.mxu0
      %v771 = vadd.f32 %v758, %v770
      %v772 = vpop.f32.mrf.mxu0
      %773 = vdwg.mxu0
      %v775 = vunpack.c.l.b16 %v724
      %v776 = vunpack.c.h.b16 %v724
      %v777 = vpack.c.b16 %v775, %v775
      %v778 = vpack.c.b16 %v776, %v776
      %797 = vmatpush.bf16.msra.mxu0 %v528
      %798 = vmatpush.bf16.msra.mxu0 %v527
      %799 = vmatpush.bf16.msra.mxu0 %v526
      %800 = vmatpush.bf16.msra.mxu0 %v525
      %801 = vmatpush.bf16.msra.mxu0 %v524
      %802 = vmatpush.bf16.msra.mxu0 %v523
      %803 = vmatpush.bf16.msra.mxu0 %v522
      %804 = vmatpush.bf16.msra.mxu0 %v521
      %805 = vmatmul.bf16.gmra.mxu0 %v777
      %v806 = vpop.f32.mrf.mxu0
      %v807 = vadd.f32 0.0, %v806
      %v808 = vpop.f32.mrf.mxu0
      %809 = vdwg.mxu0
      %810 = vmatpush.bf16.msra.mxu0 %v536
      %811 = vmatpush.bf16.msra.mxu0 %v535
      %812 = vmatpush.bf16.msra.mxu0 %v534
      %813 = vmatpush.bf16.msra.mxu0 %v533
      %814 = vmatpush.bf16.msra.mxu0 %v532
      %815 = vmatpush.bf16.msra.mxu0 %v531
      %816 = vmatpush.bf16.msra.mxu0 %v530
      %817 = vmatpush.bf16.msra.mxu0 %v529
      %818 = vmatmul.bf16.gmra.mxu0 %v778
      %v819 = vpop.f32.mrf.mxu0
      %v820 = vadd.f32 %v807, %v819
      %v821 = vpop.f32.mrf.mxu0
      %822 = vdwg.mxu0
      %v823 = vunpack.c.l.bf16 %v297
      %v824 = vmul.f32 %v771, %v823
      %v825 = vmul.f32 %v820, %v823
      %v826 = vsel %vm379, %v824, 0.0
      %827 = vadd.xlane.f32.xlu0 %v826
      %v828 = vpop.xlane.xlu0 %827
      %v829 = vsel %vm379, %v825, 0.0
      %830 = vadd.xlane.f32.xlu0 %v829
      %v831 = vpop.xlane.xlu0 %830
      %v832 = vmul.f32 %v771, %v771
      %v833 = vmul.f32 %v820, %v820
      %v834 = vsel %vm379, %v832, 0.0
      %835 = vadd.xlane.f32.xlu0 %v834
      %v836 = vpop.xlane.xlu0 %835
      %v837 = vsel %vm379, %v833, 0.0
      %838 = vadd.xlane.f32.xlu0 %v837
      %v839 = vpop.xlane.xlu0 %838
      %v840 = vrsqrt.pop %v836
      %v841 = vmul.f32 %v840, %v836
      %v842 = vmul.f32 %v841, %v840
      %v843 = vmul.f32 0.5, %v842
      %v844 = vsub.f32 1.5, %v843
      %v845 = vmul.f32 %v840, %v844
      %v846 = vmul.f32 %v836, %v845
      %vm847 = vcmp.eq.f32.partialorder %v836, inf
      %v848 = vsel %vm847, %v836, %v846
      %vm849 = vcmp.eq.f32.partialorder %v836, 0.0
      %v850 = vand.u32 %v836, 2147483648
      %v851 = vsel %vm849, %v850, %v848
      %v852 = vrsqrt.pop %v839
      %v853 = vmul.f32 %v852, %v839
      %v854 = vmul.f32 %v853, %v852
      %v855 = vmul.f32 0.5, %v854
      %v856 = vsub.f32 1.5, %v855
      %v857 = vmul.f32 %v852, %v856
      %v858 = vmul.f32 %v839, %v857
      %vm859 = vcmp.eq.f32.partialorder %v839, inf
      %v860 = vsel %vm859, %v839, %v858
      %vm861 = vcmp.eq.f32.partialorder %v839, 0.0
      %v862 = vand.u32 %v839, 2147483648
      %v863 = vsel %vm861, %v862, %v860
      %v865 = vperm.slane %v298, 0
      %v869 = vlaneseq
      %v870 = vand.u32 %v869, 127
      %v871 = vperm.slane %v851, %v870
      %v872 = vperm.slane %v863, %v870
      %vm873 = vcmask 1041409
      %v874 = vsel %vm873, %v872, %v871
      %v876 = vmul.f32 %v865, %v874
      %v877 = vmax.f32 %v876, 1e-08
      %v878 = vrcp.pop %v877
      %v880 = vperm.slane %v878, 0
      %v881 = vlaneseq
      %v882 = vshrl.u32 %v881, 7
      %884 = vset.pattern.permute.xlu0 %v882
      %885 = vperm.xlu0 %884, %v880
      %v886 = vpop.permute.xlu0 %885
      %v887 = vperm.slane %v878, 1
      %v888 = vlaneseq
      %v889 = vshrl.u32 %v888, 7
      %891 = vset.pattern.permute.xlu0 %v889
      %892 = vperm.xlu0 %891, %v887
      %v893 = vpop.permute.xlu0 %892
      %v896 = vmul.f32 %v828, %v886
      %v897 = vmul.f32 %v831, %v893
      %v898 = vmul.f32 %v896, 5.0
      %v899 = vmul.f32 %v897, 5.0
      %v900 = vmul.f32 %v898, 1.442695
      %v901 = vpow.pop %v900
      %v902 = vmul.f32 %v899, 1.442695
      %v903 = vpow.pop %v902
      %vm904 = vcmp.lt.s32.totalorder %v870, %v613
      %v905 = vsel %vm904, 1, 0
      %v906 = vcvt.s32.f32 %v905
      %909 = vset.pattern.permute.xlu0 0
      %910 = vperm.xlu0 %909, %v901
      %v911 = vpop.permute.xlu0 %910
      %912 = vset.pattern.permute.xlu0 0
      %913 = vperm.xlu0 %912, %v903
      %v914 = vpop.permute.xlu0 %913
      %v915 = vperm.slane %v911, %v870
      %v916 = vperm.slane %v914, %v870
      %v917 = vsel %vm873, %v916, %v915
      %vm918 = vcmask 64512
      %v920 = vsel %vm918, %v906, 0
      %v922 = vsel %vm918, %v917, 0
      %924 = vmatpush.xpose.msra.mxu0 0.0
      %925 = vmatpush.xpose.msra.mxu0 0.0
      %926 = vmatpush.xpose.msra.mxu0 0.0
      %927 = vmatpush.xpose.msra.mxu0 0.0
      %928 = vmatpush.xpose.msra.mxu0 0.0
      %929 = vmatpush.xpose.msra.mxu0 0.0
      %930 = vmatpush.xpose.msra.mxu0 0.0
      %931 = vmatpush.xpose.msra.mxu0 0.0
      %932 = vmatpush.xpose.msra.mxu0 0.0
      %933 = vmatpush.xpose.msra.mxu0 0.0
      %934 = vmatpush.xpose.msra.mxu0 0.0
      %935 = vmatpush.xpose.msra.mxu0 0.0
      %936 = vmatpush.xpose.msra.mxu0 0.0
      %937 = vmatpush.xpose.msra.mxu0 0.0
      %938 = vmatpush.xpose.msra.mxu0 0.0
      %939 = vmatpush.xpose.msra.mxu0 %v922
      %940 = vmatmul.f32.gmra.mxu0 %v920
      %v941 = vpop.f32.mrf.mxu0
      %v942 = vadd.f32 0.0, %v941
      %943 = vdwg.mxu0
      %v944 = vmax.f32 %v942, 1e-30
      %v945 = vlog2.pop %v944
      %v946 = vmul.f32 %v945, 0.6931472
      %v947 = vmul.f32 %v946, 10.0
      %vm948 = vcmask 8192
      %949 = vst.msk [vmem:[%s231] sm:$0x1] %vm948, %v947
      %p950 = scmp.lt.s32.totalorder %s28, 1
      %s951 = scalar_select %p950, %s28, 1
      %p952 = scmp.lt.s32.totalorder %s27, 0
      %s953 = scalar_select %p952, %s27, 0
      %s954 = sadd.s32 %s953, %s951
      %s955 = scalar_lea.vmem %s4, %s954
      // Predicated region
      $region33: #{damsm_forward.6} parent=31 // pred_check
        %p956 = pneg %p133
      $region34: #{damsm_forward.6} parent=31 // pred_check_branch
        %958 = sbr.rel (%p956) target = $region36
      $region35: #{damsm_forward.6} parent=31 // pred_region
        _
      $region36: #{damsm_forward.6} parent=31 // pred_fallthru
        _
    $region32: #{damsm_forward.6} parent=5 // pred_fallthru
      _
    %p959 = scmp.le.s32.totalorder 2, %s18
    // Predicated region
    $region37: #{damsm_forward.6} parent=5 // pred_check
      %p960 = pneg %p959
    $region38: #{damsm_forward.6} parent=5 // pred_check_branch
      %962 = sbr.rel (%p960) target = $region40
    $region39: #{damsm_forward.6} parent=5 // pred_region
      %s963 = ssub.s32 %s18, 2
      // Predicated region
      $region41: #{damsm_forward.6} parent=39 // pred_check
        %p964 = pneg %p139
      $region42: #{damsm_forward.6} parent=39 // pred_check_branch
        %966 = sbr.rel (%p964) target = $region44
      $region43: #{damsm_forward.6} parent=39 // pred_region
        %p967 = scmp.lt.s32.totalorder %s30, 1
        %s968 = scalar_select %p967, %s30, 1
        %p969 = scmp.lt.s32.totalorder %s29, 0
        %s970 = scalar_select %p969, %s29, 0
        %s971 = sadd.s32 %s970, %s968
        %s972 = scalar_lea.vmem %s4, %s971
      $region44: #{damsm_forward.6} parent=39 // pred_fallthru
        _
    $region40: #{damsm_forward.6} parent=5 // pred_fallthru
      _
  $region6: #{damsm_forward.6} parent=0 // loop_footer
    %s22 = sadd.s32 1, %s18
  $region7: #{damsm_forward.6} parent=0 // loop_footer_branch
    %17 = sbr.rel target = $region3
  $region8: #{damsm_forward.6} parent=0 // loop_exit
    _

// kernel: damsm_forward.5
$region0: #{damsm_forward.5}
  #allocation0 [shape = 'u32[]', space=smem, size = 0x4, offset = 0x4, fixed_abs, tag = 'smem constant byte address 0x4 - core index']
  #allocation1 [shape = 'u32[72,128]{1,0:T(1,128)}', space=vmem, size = 0x9000, scoped, tag = 'internal scratch']
  %s0 = inlined_call_operand.vmem [shape: s32[2,1], index: 0, kind: input, shape index: {}]
  %s1 = inlined_call_operand.vmem [shape: f32[2,8,32], index: 1, kind: input, shape index: {}]
  %s2 = inlined_call_operand.vmem [shape: f32[32,32], index: 2, kind: input, shape index: {}]
  %s3 = inlined_call_operand.vmem [shape: bf16[2,8,32], index: 3, kind: output, shape index: {0}]
  %s4 = inlined_call_operand.vmem [shape: f32[2,32], index: 4, kind: output, shape index: {1}]
  %s5 = inlined_call_operand.vmem [shape: f32[2,8], index: 5, kind: output, shape index: {2}]
  %6 = xla_tuple %s3, %s4, %s5
  %s7 = sld [smem:[#allocation0]]
  $region38: #{damsm_forward.5} parent=0
    _
  %s9 = ssub.s32 1, %s7
  %s10 = scalar_select 0, %s9, %s7
  // Predicated region
  $region2: #{damsm_forward.5} parent=0 // pred_check
    _
  $region3: #{damsm_forward.5} parent=0 // pred_check_branch
    %12 = sbr.rel (0) target = $region5
  $region4: #{damsm_forward.5} parent=0 // pred_region
    _
  $region5: #{damsm_forward.5} parent=0 // pred_fallthru
    _
  // Predicated region
  $region6: #{damsm_forward.5} parent=0 // pred_check
    _
  $region7: #{damsm_forward.5} parent=0 // pred_check_branch
    %14 = sbr.rel (0) target = $region9
  $region8: #{damsm_forward.5} parent=0 // pred_region
    _
  $region9: #{damsm_forward.5} parent=0 // pred_fallthru
    _
  // Predicated region
  $region10: #{damsm_forward.5} parent=0 // pred_check
    _
  $region11: #{damsm_forward.5} parent=0 // pred_check_branch
    %16 = sbr.rel (0) target = $region13
  $region12: #{damsm_forward.5} parent=0 // pred_region
    _
  $region13: #{damsm_forward.5} parent=0 // pred_fallthru
    _
  %v17 = vld [vmem:[%s1] sm:$0xff]
  %v18 = vld [vmem:[%s1 + $0x8] sm:$0xff]
  %v19 = vld [vmem:[%s2] sm:$0xff]
  %v20 = vld [vmem:[%s2 + $0x8] sm:$0xff]
  %v21 = vld [vmem:[%s2 + $0x10] sm:$0xff]
  %v22 = vld [vmem:[%s2 + $0x18] sm:$0xff]
  %vm23 = vcmask 261120
  %v25 = vsel %vm23, %v17, 0
  %v28 = vsel %vm23, %v18, 0
  %30 = vmatpush.msra.mxu0 0.0
  %31 = vmatpush.msra.mxu0 0.0
  %32 = vmatpush.msra.mxu0 0.0
  %33 = vmatpush.msra.mxu0 0.0
  %34 = vmatpush.msra.mxu0 0.0
  %35 = vmatpush.msra.mxu0 0.0
  %36 = vmatpush.msra.mxu0 0.0
  %37 = vmatpush.msra.mxu0 0.0
  %38 = vmatpush.msra.mxu0 0.0
  %39 = vmatpush.msra.mxu0 0.0
  %40 = vmatpush.msra.mxu0 0.0
  %41 = vmatpush.msra.mxu0 0.0
  %42 = vmatpush.msra.mxu0 %v22
  %43 = vmatpush.msra.mxu0 %v21
  %44 = vmatpush.msra.mxu0 %v20
  %45 = vmatpush.msra.mxu0 %v19
  %46 = vmatmul.f32.gmra.mxu0 %v25
  %v47 = vpop.f32.mrf.mxu0
  %v48 = vadd.f32 0.0, %v47
  %49 = vmatmul.f32.gmra.mxu0 %v28
  %v50 = vpop.f32.mrf.mxu0
  %v51 = vadd.f32 0.0, %v50
  %52 = vdwg.mxu0
  %v53 = vpack.c.bf16 %v48, %v48
  %v54 = vpack.c.bf16 %v51, %v51
  %vm55 = vcmask 257024
  %56 = vst.msk [vmem:[%s3] sm:$0xf] %vm55, %v53
  %57 = vst.msk [vmem:[%s3 + $0x4] sm:$0xf] %vm55, %v54
  %v58 = vmul.f32 %v48, %v48
  %v59 = vmul.f32 %v51, %v51
  %v60 = vsel %vm23, %v58, 0.0
  %61 = vadd.xlane.f32.xlu0 %v60
  %v62 = vpop.xlane.xlu0 %61
  %v63 = vsel %vm23, %v59, 0.0
  %64 = vadd.xlane.f32.xlu0 %v63
  %v65 = vpop.xlane.xlu0 %64
  %v66 = vrsqrt.pop %v62
  %v67 = vmul.f32 %v66, %v62
  %v68 = vmul.f32 %v67, %v66
  %v69 = vmul.f32 0.5, %v68
  %v70 = vsub.f32 1.5, %v69
  %v71 = vmul.f32 %v66, %v70
  %v72 = vmul.f32 %v62, %v71
  %vm73 = vcmp.eq.f32.partialorder %v62, inf
  %v74 = vsel %vm73, %v62, %v72
  %vm75 = vcmp.eq.f32.partialorder %v62, 0.0
  %v76 = vand.u32 %v62, 2147483648
  %v77 = vsel %vm75, %v76, %v74
  %v78 = vrsqrt.pop %v65
  %v79 = vmul.f32 %v78, %v65
  %v80 = vmul.f32 %v79, %v78
  %v81 = vmul.f32 0.5, %v80
  %v82 = vsub.f32 1.5, %v81
  %v83 = vmul.f32 %v78, %v82
  %v84 = vmul.f32 %v65, %v83
  %vm85 = vcmp.eq.f32.partialorder %v65, inf
  %v86 = vsel %vm85, %v65, %v84
  %vm87 = vcmp.eq.f32.partialorder %v65, 0.0
  %v88 = vand.u32 %v65, 2147483648
  %v89 = vsel %vm87, %v88, %v86
  %v92 = vlaneseq
  %v93 = vand.u32 %v92, 127
  %v94 = vperm.slane %v77, %v93
  %v95 = vperm.slane %v89, %v93
  %vm96 = vcmask 1041409
  %v97 = vsel %vm96, %v95, %v94
  %vm99 = vcmask 58368
  %100 = vst.msk [vmem:[%s5] sm:$0x3] %vm99, %v97
  %v101 = vld [vmem:[%s0] sm:$0x3]
  %102 = vset.pattern.permute.xlu0 0
  %103 = vperm.xlu0 %102, %v101
  %v104 = vpop.permute.xlu0 %103
  %vm105 = vcmp.lt.s32.totalorder %v93, %v104
  %v106 = vsel %vm105, 1, 0
  %v107 = vcvt.s32.f32 %v106
  %v108 = vsel %vm99, %v107, 0.0
  %109 = vadd.xlane.f32.xlu0 %v108
  %v110 = vpop.xlane.xlu0 %109
  %v111 = vmax.f32 %v110, 1.0
  %v112 = vperm.slane %v107, 0
  %v113 = vlaneseq
  %v114 = vshrl.u32 %v113, 7
  %116 = vset.pattern.permute.xlu0 %v114
  %117 = vperm.xlu0 %116, %v112
  %v118 = vpop.permute.xlu0 %117
  %v119 = vperm.slane %v107, 1
  %v120 = vlaneseq
  %v121 = vshrl.u32 %v120, 7
  %123 = vset.pattern.permute.xlu0 %v121
  %124 = vperm.xlu0 %123, %v119
  %v125 = vpop.permute.xlu0 %124
  %v126 = vmul.f32 %v48, %v118
  %v127 = vmul.f32 %v51, %v125
  %v128 = vsel %vm23, %v126, 0.0
  %v129 = vrot.slane %v128, 4
  %v130 = vadd.f32 %v128, %v129
  %v131 = vrot.slane %v130, 2
  %v132 = vadd.f32 %v130, %v131
  %v133 = vrot.slane %v132, 1
  %v134 = vadd.f32 %v132, %v133
  %v135 = vsel %vm23, %v127, 0.0
  %v136 = vrot.slane %v135, 4
  %v137 = vadd.f32 %v135, %v136
  %v138 = vrot.slane %v137, 2
  %v139 = vadd.f32 %v137, %v138
  %v140 = vrot.slane %v139, 1
  %v141 = vadd.f32 %v139, %v140
  %v143 = vrot.slane %v111, 1
  %v146 = vrcp.pop %v111
  %v147 = vmul.f32 %v111, %v146
  %v148 = vsub.f32 1.0, %v147
  %v149 = vmul.f32 %v146, %v148
  %v150 = vadd.f32 %v146, %v149
  %vm151 = vweird.f32 %v111
  %vm152 = vweird.f32 %v146
  %vm153 = vmor %vm151, %vm152
  %v154 = vsel %vm153, %v146, %v150
  %v155 = vand.u32 2147483647, %v111
  %vm156 = vcmp.eq.f32.partialorder %v155, 8.507059e+37
  %v157 = vand.u32 %v111, 2147483648
  %v158 = vor.u32 1.1754944e-38, %v157
  %v159 = vsel %vm156, %v158, %v154
  %v160 = vmul.f32 %v134, %v159
  %v161 = vrcp.pop %v143
  %v162 = vmul.f32 %v143, %v161
  %v163 = vsub.f32 1.0, %v162
  %v164 = vmul.f32 %v161, %v163
  %v165 = vadd.f32 %v161, %v164
  %vm166 = vweird.f32 %v143
  %vm167 = vweird.f32 %v161
  %vm168 = vmor %vm166, %vm167
  %v169 = vsel %vm168, %v161, %v165
  %v170 = vand.u32 2147483647, %v143
  %vm171 = vcmp.eq.f32.partialorder %v170, 8.507059e+37
  %v172 = vand.u32 %v143, 2147483648
  %v173 = vor.u32 1.1754944e-38, %v172
  %v174 = vsel %vm171, %v173, %v169
  %v175 = vmul.f32 %v141, %v174
  %v178 = vrot.slane %v175, 7
  %v179 = vsel %vm96, %v178, %v160
  %vm181 = vcmask 254976
  %182 = vst.msk [vmem:[%s4] sm:$0x3] %vm181, %v179
  // Predicated region
  $region14: #{damsm_forward.5} parent=0 // pred_check
    _
  $region15: #{damsm_forward.5} parent=0 // pred_check_branch
    %184 = sbr.rel (0) target = $region17
  $region16: #{damsm_forward.5} parent=0 // pred_region
    _
  $region17: #{damsm_forward.5} parent=0 // pred_fallthru
    _
  // Predicated region
  $region18: #{damsm_forward.5} parent=0 // pred_check
    _
  $region19: #{damsm_forward.5} parent=0 // pred_check_branch
    %186 = sbr.rel (0) target = $region21
  $region20: #{damsm_forward.5} parent=0 // pred_region
    _
  $region21: #{damsm_forward.5} parent=0 // pred_fallthru
    _
  // Predicated region
  $region22: #{damsm_forward.5} parent=0 // pred_check
    _
  $region23: #{damsm_forward.5} parent=0 // pred_check_branch
    %188 = sbr.rel (0) target = $region25
  $region24: #{damsm_forward.5} parent=0 // pred_region
    _
  $region25: #{damsm_forward.5} parent=0 // pred_fallthru
    _
  // Predicated region
  $region26: #{damsm_forward.5} parent=0 // pred_check
    _
  $region27: #{damsm_forward.5} parent=0 // pred_check_branch
    %190 = sbr.rel (0) target = $region29
  $region28: #{damsm_forward.5} parent=0 // pred_region
    _
  $region29: #{damsm_forward.5} parent=0 // pred_fallthru
    _
  // Predicated region
  $region30: #{damsm_forward.5} parent=0 // pred_check
    _
  $region31: #{damsm_forward.5} parent=0 // pred_check_branch
    %192 = sbr.rel (0) target = $region33
  $region32: #{damsm_forward.5} parent=0 // pred_region
    _
  $region33: #{damsm_forward.5} parent=0 // pred_fallthru
    _
  // Predicated region
  $region34: #{damsm_forward.5} parent=0 // pred_check
    _
  $region35: #{damsm_forward.5} parent=0 // pred_check_branch
    %194 = sbr.rel (0) target = $region37
  $region36: #{damsm_forward.5} parent=0 // pred_region
    _
  $region37: #{damsm_forward.5} parent=0 // pred_fallthru
    _

// kernel: damsm_forward.7
$region0: #{damsm_forward.7}
  #allocation0 [shape = 'u32[]', space=smem, size = 0x4, offset = 0x4, fixed_abs, tag = 'smem constant byte address 0x4 - core index']
  #allocation1 [shape = 'u32[72,128]{1,0:T(1,128)}', space=vmem, size = 0x9000, scoped, tag = 'internal scratch']
  %s0 = inlined_call_operand.vmem [shape: f32[2,32], index: 0, kind: input, shape index: {}]
  %s1 = inlined_call_operand.vmem [shape: f32[2,32], index: 1, kind: input, shape index: {}]
  %s2 = inlined_call_operand.vmem [shape: f32[2,2], index: 2, kind: output, shape index: {}]
  %s3 = sld [smem:[#allocation0]]
  $region18: #{damsm_forward.7} parent=0
    _
  %s5 = ssub.s32 1, %s3
  %s6 = scalar_select 0, %s5, %s3
  // Predicated region
  $region2: #{damsm_forward.7} parent=0 // pred_check
    _
  $region3: #{damsm_forward.7} parent=0 // pred_check_branch
    %8 = sbr.rel (0) target = $region5
  $region4: #{damsm_forward.7} parent=0 // pred_region
    _
  $region5: #{damsm_forward.7} parent=0 // pred_fallthru
    _
  // Predicated region
  $region6: #{damsm_forward.7} parent=0 // pred_check
    _
  $region7: #{damsm_forward.7} parent=0 // pred_check_branch
    %10 = sbr.rel (0) target = $region9
  $region8: #{damsm_forward.7} parent=0 // pred_region
    _
  $region9: #{damsm_forward.7} parent=0 // pred_fallthru
    _
  %v11 = vld [vmem:[%s0] sm:$0x3]
  %v12 = vld [vmem:[%s1] sm:$0x3]
  %v13 = vmul.f32 %v11, %v11
  %vm14 = vcmask 254976
  %v15 = vsel %vm14, %v13, 0.0
  %16 = vadd.xlane.f32.xlu0 %v15
  %v17 = vpop.xlane.xlu0 %16
  %v18 = vrsqrt.pop %v17
  %v19 = vmul.f32 %v18, %v17
  %v20 = vmul.f32 %v19, %v18
  %v21 = vmul.f32 0.5, %v20
  %v22 = vsub.f32 1.5, %v21
  %v23 = vmul.f32 %v18, %v22
  %v24 = vmul.f32 %v17, %v23
  %vm25 = vcmp.eq.f32.partialorder %v17, inf
  %v26 = vsel %vm25, %v17, %v24
  %vm27 = vcmp.eq.f32.partialorder %v17, 0.0
  %v28 = vand.u32 %v17, 2147483648
  %v29 = vsel %vm27, %v28, %v26
  %v30 = vmul.f32 %v12, %v12
  %v31 = vsel %vm14, %v30, 0.0
  %32 = vadd.xlane.f32.xlu0 %v31
  %v33 = vpop.xlane.xlu0 %32
  %v34 = vrsqrt.pop %v33
  %v35 = vmul.f32 %v34, %v33
  %v36 = vmul.f32 %v35, %v34
  %v37 = vmul.f32 0.5, %v36
  %v38 = vsub.f32 1.5, %v37
  %v39 = vmul.f32 %v34, %v38
  %v40 = vmul.f32 %v33, %v39
  %vm41 = vcmp.eq.f32.partialorder %v33, inf
  %v42 = vsel %vm41, %v33, %v40
  %vm43 = vcmp.eq.f32.partialorder %v33, 0.0
  %v44 = vand.u32 %v33, 2147483648
  %v45 = vsel %vm43, %v44, %v42
  %vm46 = vcmask 261120
  %v48 = vsel %vm46, %v11, 0
  %v51 = vsel %vm46, %v12, 0
  %53 = vmatpush.xpose.msra.mxu0 0.0
  %54 = vmatpush.xpose.msra.mxu0 0.0
  %55 = vmatpush.xpose.msra.mxu0 0.0
  %56 = vmatpush.xpose.msra.mxu0 0.0
  %57 = vmatpush.xpose.msra.mxu0 0.0
  %58 = vmatpush.xpose.msra.mxu0 0.0
  %59 = vmatpush.xpose.msra.mxu0 0.0
  %60 = vmatpush.xpose.msra.mxu0 0.0
  %61 = vmatpush.xpose.msra.mxu0 0.0
  %62 = vmatpush.xpose.msra.mxu0 0.0
  %63 = vmatpush.xpose.msra.mxu0 0.0
  %64 = vmatpush.xpose.msra.mxu0 0.0
  %65 = vmatpush.xpose.msra.mxu0 0.0
  %66 = vmatpush.xpose.msra.mxu0 0.0
  %67 = vmatpush.xpose.msra.mxu0 0.0
  %68 = vmatpush.xpose.msra.mxu0 %v51
  %69 = vmatmul.f32.gmra.mxu0 %v48
  %v70 = vpop.f32.mrf.mxu0
  %v71 = vadd.f32 0.0, %v70
  %72 = vdwg.mxu0
  %73 = vxpose.xlu0.b32.start [1/16] %v45, 128
  %74 = vxpose.xlu0.b32.cont [2/16] 0.0, 128
  %75 = vxpose.xlu0.b32.cont [3/16] 0.0, 128
  %76 = vxpose.xlu0.b32.cont [4/16] 0.0, 128
  %77 = vxpose.xlu0.b32.cont [5/16] 0.0, 128
  %78 = vxpose.xlu0.b32.cont [6/16] 0.0, 128
  %79 = vxpose.xlu0.b32.cont [7/16] 0.0, 128
  %80 = vxpose.xlu0.b32.cont [8/16] 0.0, 128
  %81 = vxpose.xlu0.b32.cont [9/16] 0.0, 128
  %82 = vxpose.xlu0.b32.cont [10/16] 0.0, 128
  %83 = vxpose.xlu0.b32.cont [11/16] 0.0, 128
  %84 = vxpose.xlu0.b32.cont [12/16] 0.0, 128
  %85 = vxpose.xlu0.b32.cont [13/16] 0.0, 128
  %86 = vxpose.xlu0.b32.cont [14/16] 0.0, 128
  %87 = vxpose.xlu0.b32.cont [15/16] 0.0, 128
  %88 = vxpose.xlu0.b32.end [16/16] 0.0, 128
  %v89 = vpop.trf.xlu0
  %v90 = vpop.trf.xlu0
  %v91 = vpop.trf.xlu0
  %v92 = vpop.trf.xlu0
  %v93 = vpop.trf.xlu0
  %v94 = vpop.trf.xlu0
  %v95 = vpop.trf.xlu0
  %v96 = vpop.trf.xlu0
  %v97 = vpop.trf.xlu0
  %v98 = vpop.trf.xlu0
  %v99 = vpop.trf.xlu0
  %v100 = vpop.trf.xlu0
  %v101 = vpop.trf.xlu0
  %v102 = vpop.trf.xlu0
  %v103 = vpop.trf.xlu0
  %v104 = vpop.trf.xlu0
  %v105 = vperm.slane %v89, 0
  %v106 = vmul.f32 %v29, %v105
  %v107 = vmax.f32 %v106, 1e-08
  %v108 = vrcp.pop %v107
  %v109 = vmul.f32 %v107, %v108
  %v110 = vsub.f32 1.0, %v109
  %v111 = vmul.f32 %v108, %v110
  %v112 = vadd.f32 %v108, %v111
  %vm113 = vweird.f32 %v107
  %vm114 = vweird.f32 %v108
  %vm115 = vmor %vm113, %vm114
  %v116 = vsel %vm115, %v108, %v112
  %v117 = vand.u32 2147483647, %v107
  %vm118 = vcmp.eq.f32.partialorder %v117, 8.507059e+37
  %v119 = vand.u32 %v107, 2147483648
  %v120 = vor.u32 1.1754944e-38, %v119
  %v121 = vsel %vm118, %v120, %v116
  %v122 = vmul.f32 %v71, %v121
  %v123 = vmul.f32 %v122, 10.0
  %vm124 = vcmask 9216
  %125 = vst.msk [vmem:[%s2] sm:$0x3] %vm124, %v123
  // Predicated region
  $region10: #{damsm_forward.7} parent=0 // pred_check
    _
  $region11: #{damsm_forward.7} parent=0 // pred_check_branch
    %127 = sbr.rel (0) target = $region13
  $region12: #{damsm_forward.7} parent=0 // pred_region
    _
  $region13: #{damsm_forward.7} parent=0 // pred_fallthru
    _
  // Predicated region
  $region14: #{damsm_forward.7} parent=0 // pred_check
    _
  $region15: #{damsm_forward.7} parent=0 // pred_check_branch
    %129 = sbr.rel (0) target = $region17
  $region16: #{damsm_forward.7} parent=0 // pred_region
    _
  $region17: #{damsm_forward.7} parent=0 // pred_fallthru
    _

</llo_original>
